<compile_context>
chip_gen: v7x
topology: tpu7x:2x2x1
jax: 0.10.0
libtpu: 0.0.40
codegen_flags: <defaults>
</compile_context>

<pallas_src>
import functools

import jax
import jax.numpy as jnp
from jax import lax
from jax.experimental import pallas as pl
from jax.experimental.pallas import tpu as pltpu


# ----------------------------------------------------------------------------
# Host-side tile choosers (static shapes only).
# ----------------------------------------------------------------------------
def _legal_s_tiles(S):
    """S tiles satisfying the (8,128) block rule: multiple of 8 or == S."""
    cands = {S}
    cands.update(t for t in range(8, S + 1, 8) if S % t == 0)
    return sorted(cands, reverse=True)


def _choose_stats_tiles(S, HW2, budget_bytes):
    """(ts, ch) for the stats pass. ch is a multiple of 128 (even), so re/im
    pair parity is preserved inside every chunk."""
    s_cands = _legal_s_tiles(S)
    for ts in s_cands:                       # prefer full-width lanes, tile S
        if ts * HW2 * 4 <= budget_bytes:
            return ts, HW2
    ts = s_cands[-1]
    c_cands = sorted({HW2} | {c for c in range(128, HW2, 128) if HW2 % c == 0},
                     reverse=True)
    for ch in c_cands:
        if ts * ch * 4 <= budget_bytes:
            return ts, ch
    return ts, c_cands[-1]                   # smallest legal block (may exceed budget)


def _choose_conv_s_tile(S, HW2, B, budget_bytes):
    """S tile for the fused pass (block = (1, ts, H*W*2); the full plane is
    needed per block for the in-row rolls). Keeps >= 2 grid steps when possible
    so v7x's two TensorCores both get work."""
    cands = _legal_s_tiles(S)
    per_s = HW2 * 4
    fit = [t for t in cands if t * per_s <= budget_bytes]
    ts = fit[0] if fit else cands[-1]
    if B * (S // ts) < 2:
        smaller = [t for t in cands if t < ts]
        if smaller:
            ts = smaller[0]
    return ts


# ----------------------------------------------------------------------------
# Kernel 1: raw-moment reduction over the interleaved [B, S, H*W*2] view.
# Per-lane column sums accumulate in VMEM scratch; the cross-lane reduction to
# the five per-batch scalars happens once, at the last chunk of each batch.
#   per batch: sum(re), sum(im), sum(re^2), sum(im^2), sum(re*im)
# TODO(synk): raw-moment accumulation in f32 can cancel badly when |mean| >>
# std; a compensated (Kahan) accumulate would be needed for such data.
# ----------------------------------------------------------------------------
def _stats_kernel(x_ref, sre_ref, sim_ref, sxx_ref, syy_ref, sxy_ref, acc_ref):
    si = pl.program_id(1)
    ci = pl.program_id(2)
    first = jnp.logical_and(si == 0, ci == 0)
    last = jnp.logical_and(si == pl.num_programs(1) - 1,
                           ci == pl.num_programs(2) - 1)

    x = x_ref[0]                                          # (ts, ch) interleaved
    ch = x.shape[1]
    lane = lax.broadcasted_iota(jnp.int32, (1, ch), 1)
    even = (lane & 1) == 0                                # "re" lane positions

    x2 = x * x
    nxt = pltpu.roll(x, ch - 1, axis=1)                   # nxt[i] = x[i+1]
    re_im = jnp.where(even, x * nxt, 0.0)                 # re*im at even lanes
    xe = jnp.where(even, x, 0.0)
    x2e = jnp.where(even, x2, 0.0)

    @pl.when(first)
    def _():
        acc_ref[...] = jnp.zeros_like(acc_ref)

    acc_ref[0:1, :] += jnp.sum(xe, axis=0, keepdims=True)
    acc_ref[1:2, :] += jnp.sum(x, axis=0, keepdims=True)
    acc_ref[2:3, :] += jnp.sum(x2e, axis=0, keepdims=True)
    acc_ref[3:4, :] += jnp.sum(x2, axis=0, keepdims=True)
    acc_ref[4:5, :] += jnp.sum(re_im, axis=0, keepdims=True)

    @pl.when(last)
    def _():
        s_re = jnp.sum(acc_ref[0:1, :])
        s_all = jnp.sum(acc_ref[1:2, :])
        s_rr = jnp.sum(acc_ref[2:3, :])
        s_qq = jnp.sum(acc_ref[3:4, :])
        s_ri = jnp.sum(acc_ref[4:5, :])
        sre_ref[...] = jnp.zeros_like(sre_ref) + s_re
        sim_ref[...] = jnp.zeros_like(sim_ref) + (s_all - s_re)
        sxx_ref[...] = jnp.zeros_like(sxx_ref) + s_rr
        syy_ref[...] = jnp.zeros_like(syy_ref) + (s_qq - s_rr)
        sxy_ref[...] = jnp.zeros_like(sxy_ref) + s_ri


def compute_stats(xr, budget_bytes=6 << 20):
    B, S, HW2 = xr.shape
    ts, ch = _choose_stats_tiles(S, HW2, budget_bytes)
    n_s, n_c = S // ts, HW2 // ch
    block_bytes = ts * ch * 4
    vmem_limit = int(min(110 << 20,
                         max(32 << 20, 6 * block_bytes + 8 * ch * 4 + (4 << 20))))

    out_shape = tuple(jax.ShapeDtypeStruct((B, 1, 1), jnp.float32)
                      for _ in range(5))
    out_specs = tuple(pl.BlockSpec((1, 1, 1), lambda b, s, c: (b, 0, 0))
                      for _ in range(5))
    outs = pl.pallas_call(
        _stats_kernel,
        out_shape=out_shape,
        grid=(B, n_s, n_c),
        in_specs=[pl.BlockSpec((1, ts, ch), lambda b, s, c: (b, s, c))],
        out_specs=out_specs,
        scratch_shapes=[pltpu.VMEM((8, ch), jnp.float32)],
        compiler_params=pltpu.CompilerParams(
            dimension_semantics=("parallel", "arbitrary", "arbitrary"),
            vmem_limit_bytes=vmem_limit),
    )(xr)
    return tuple(o.reshape(B) for o in outs)


# ----------------------------------------------------------------------------
# Kernel 2: fused normalize(+clamp) -> 3x3 conv with folded unnormalize+mean,
# on the lane-dense interleaved plane.  Per-batch table (44 f32 in SMEM):
#   [0:6]   inv_xx, inv_yy, inv_xy, inv_yx, c_re, c_im   (normalize coefs)
#   [6:42]  folded conv weights  (o, ci, tap) row-major
#   [42:44] folded bias (includes +mean)
# ----------------------------------------------------------------------------
def _fused_norm_conv_kernel(tab_ref, x_ref, o_ref, *, H, W):
    b = pl.program_id(0)
    base = b * 44

    inv_xx = tab_ref[base + 0]
    inv_yy = tab_ref[base + 1]
    inv_xy = tab_ref[base + 2]
    inv_yx = tab_ref[base + 3]
    c_re = tab_ref[base + 4]
    c_im = tab_ref[base + 5]
    w = [[[tab_ref[base + 6 + (o * 2 + ci) * 9 + t] for t in range(9)]
          for ci in range(2)] for o in range(2)]
    b_re = tab_ref[base + 42]
    b_im = tab_ref[base + 43]

    x = x_ref[0]                                          # (ts, hw2) interleaved
    hw2 = x.shape[1]
    w2 = 2 * W

    # per-lane (even=re-out / odd=im-out) coefficient rows — hoisted, (1, hw2)
    lane = lax.broadcasted_iota(jnp.int32, (1, hw2), 1)
    even = (lane & 1) == 0
    col = lane % w2                                       # 2*x + channel

    a_c = jnp.where(even, inv_xx, inv_yy)
    b_c = jnp.where(even, inv_xy, inv_yx)
    c_c = jnp.where(even, c_re, c_im)
    d_c = jnp.where(even, b_re, b_im)
    w_same = [jnp.where(even, w[0][0][t], w[1][1][t]) for t in range(9)]
    w_cross = [jnp.where(even, w[0][1][t], w[1][0][t]) for t in range(9)]

    # combined zero-halo (valid-source) predicates, one per shift direction
    row_ok = {-1: lane >= w2, 1: lane < w2 * (H - 1)}
    col_ok = {-1: col >= 2, 1: col < w2 - 2}

    # normalize: inv_cov @ (x - mean), clamp +-6  (stays interleaved)
    prev = pltpu.roll(x, 1, axis=1)                       # prev[i] = x[i-1]
    nxt = pltpu.roll(x, hw2 - 1, axis=1)                  # nxt[i]  = x[i+1]
    partner = jnp.where(even, nxt, prev)                  # other channel, same pixel
    nx = jnp.clip(a_c * x + b_c * partner + c_c, -6.0, 6.0)

    nprev = pltpu.roll(nx, 1, axis=1)
    nnxt = pltpu.roll(nx, hw2 - 1, axis=1)
    npx = jnp.where(even, nnxt, nprev)                    # partner of nx

    # 3x3 conv (pad=1) + folded unnormalize: one roll per tap per operand
    acc = w_same[4] * nx + w_cross[4] * npx               # center tap
    for dy in (-1, 0, 1):
        for dx in (-1, 0, 1):
            if dy == 0 and dx == 0:
                continue
            t = (dy + 1) * 3 + (dx + 1)
            shift = (-2 * (dy * W + dx)) % hw2            # out[L] <- in[L + 2*(dy*W+dx)]
            sn = pltpu.roll(nx, shift, axis=1)
            sp = pltpu.roll(npx, shift, axis=1)
            if dx == 0:
                mask = row_ok[dy]
            elif dy == 0:
                mask = col_ok[dx]
            else:
                mask = jnp.logical_and(row_ok[dy], col_ok[dx])
            acc = acc + jnp.where(mask, w_same[t] * sn + w_cross[t] * sp, 0.0)

    o_ref[0] = acc + d_c


def fused_norm_conv_unnorm(xr, table, H, W, budget_bytes=6 << 20):
    B, S, HW2 = xr.shape
    ts = _choose_conv_s_tile(S, HW2, B, budget_bytes)
    block_bytes = ts * HW2 * 4
    vmem_limit = int(min(110 << 20, max(32 << 20, 10 * block_bytes + (4 << 20))))
    kernel = functools.partial(_fused_norm_conv_kernel, H=H, W=W)
    return pl.pallas_call(
        kernel,
        out_shape=jax.ShapeDtypeStruct(xr.shape, jnp.float32),
        grid=(B, S // ts),
        in_specs=[
            pl.BlockSpec(memory_space=pltpu.MemorySpace.SMEM),   # (B*44,) table
            pl.BlockSpec((1, ts, HW2), lambda b, s: (b, s, 0)),
        ],
        out_specs=pl.BlockSpec((1, ts, HW2), lambda b, s: (b, s, 0)),
        compiler_params=pltpu.CompilerParams(
            dimension_semantics=("parallel", "parallel"),
            vmem_limit_bytes=vmem_limit),
    )(table, xr)


# ----------------------------------------------------------------------------
# O(B) scalar glue: complex_pseudocovariance eigen math + matrix_invert.
# ----------------------------------------------------------------------------
def _covariance_halves(cxx, cyy, cxy):
    # TODO(synk): degenerate case (cxy==0, cxx==cyy) yields 0/0 exactly like the
    # original PyTorch code; an eps guard would be needed for production data.
    tr = (cxx + cyy) / 2.0
    rad = jnp.sqrt(tr * tr - cxx * cyy + cxy * cxy)
    s1 = tr - rad
    s2 = tr + rad
    v1x, v1y = s1 - cyy, cxy
    v2x, v2y = s2 - cyy, cxy
    n1 = jnp.sqrt(v1x * v1x + v1y * v1y)
    n2 = jnp.sqrt(v2x * v2x + v2y * v2y)
    v1x, v1y = v1x / n1, v1y / n1
    v2x, v2y = v2x / n2, v2y / n2
    det = v1x * v2y - v2x * v1y
    s1 = jnp.sqrt(s1) / det
    s2 = jnp.sqrt(s2) / det
    cov_xx = v1x * v2y * s1 - v1y * v2x * s2
    cov_yy = v1x * v2y * s2 - v1y * v2x * s1
    cov_xy = v1x * v2x * (s2 - s1)
    cov_yx = v1y * v2y * (s1 - s2)
    return cov_xx, cov_xy, cov_yx, cov_yy


# ----------------------------------------------------------------------------
# Full forward = ComplexNormWrapper.forward
# ----------------------------------------------------------------------------
def complex_norm_wrapper_forward(x, conv_w, conv_b):
    """x: [B, S, H, W, 2] float32 (PyTorch [nBatch, nSmaps, nFE, nPE, 2])."""
    B, S, H, W, _ = x.shape
    HW2 = H * W * 2
    xr = x.astype(jnp.float32).reshape(B, S, HW2)      # free reshape, no transpose

    # --- set_normalization: one tiled raw-moment pass ----------------------
    sre, sim, sxx, syy, sxy = compute_stats(xr)        # each (B,)
    n_per = S * H * W
    mean = (jnp.sum(sre) + jnp.sum(sim)) / (B * n_per * 2)   # torch.mean(input)
    Sxx = sxx - 2.0 * mean * sre + mean * mean * n_per
    Syy = syy - 2.0 * mean * sim + mean * mean * n_per
    Sxy = sxy - mean * (sre + sim) + mean * mean * n_per
    denom = H * W - 1                                  # PyTorch quirk (N = nFE*nPE)
    cov_xx, cov_xy, cov_yx, cov_yy = _covariance_halves(
        Sxx / denom, Syy / denom, Sxy / denom)

    # matrix_invert of the covariance half (for normalize)
    idet = cov_xx * cov_yy - cov_xy * cov_yx
    inv_xx, inv_xy = cov_yy / idet, -cov_xy / idet
    inv_yx, inv_yy = -cov_yx / idet, cov_xx / idet
    mean_b = jnp.broadcast_to(mean, (B,)).astype(jnp.float32)

    c_re = -(inv_xx + inv_xy) * mean_b
    c_im = -(inv_yx + inv_yy) * mean_b
    coefs = jnp.stack([inv_xx, inv_yy, inv_xy, inv_yx, c_re, c_im], axis=1)

    # fold unnormalize (cov @ y + mean) into the conv weights/bias — exact
    cov = jnp.stack([jnp.stack([cov_xx, cov_xy], axis=-1),
                     jnp.stack([cov_yx, cov_yy], axis=-1)], axis=-2)   # (B,2,2)
    w_fold = jnp.einsum("bok,kihw->boihw", cov, conv_w.astype(jnp.float32))
    b_fold = jnp.einsum("bok,k->bo", cov, conv_b.astype(jnp.float32)) \
        + mean_b[:, None]

    table = jnp.concatenate(
        [coefs, w_fold.reshape(B, 36), b_fold], axis=1).reshape(-1)    # (B*44,)

    # --- one fused pass: normalize+clamp -> conv -> (folded) unnormalize ---
    yr = fused_norm_conv_unnorm(xr, table, H, W)       # [B, S, H*W*2]
    return yr.reshape(B, S, H, W, 2)                   # free reshape


# ----------------------------------------------------------------------------
# Pure-JAX reference mimicking the PyTorch module (for correctness check).
# ----------------------------------------------------------------------------
def reference_forward(x, conv_w, conv_b):
    B, S, H, W, _ = x.shape
    mean = jnp.mean(x)
    xm = x - mean
    re, im = xm[..., 0], xm[..., 1]
    N = H * W
    cxx = jnp.sum(re * re, axis=(1, 2, 3)) / (N - 1)
    cyy = jnp.sum(im * im, axis=(1, 2, 3)) / (N - 1)
    cxy = jnp.sum(re * im, axis=(1, 2, 3)) / (N - 1)
    cov_xx, cov_xy, cov_yx, cov_yy = _covariance_halves(cxx, cyy, cxy)

    idet = cov_xx * cov_yy - cov_xy * cov_yx
    inv_xx, inv_xy = cov_yy / idet, -cov_xy / idet
    inv_yx, inv_yy = -cov_yx / idet, cov_xx / idet

    def bb(v):
        return v[:, None, None, None]

    nre = bb(inv_xx) * re + bb(inv_xy) * im
    nim = bb(inv_yx) * re + bb(inv_yy) * im
    img = jnp.clip(jnp.stack([nre, nim], axis=-1), -6.0, 6.0)

    out = jnp.transpose(img.reshape(B * S, H, W, 2), (0, 3, 1, 2))
    out = lax.conv_general_dilated(
        out, conv_w, window_strides=(1, 1), padding="SAME",
        dimension_numbers=("NCHW", "OIHW", "NCHW"))
    out = out + conv_b[None, :, None, None]
    out = jnp.transpose(out, (0, 2, 3, 1)).reshape(B, S, H, W, 2)

    re2, im2 = out[..., 0], out[..., 1]
    ure = bb(cov_xx) * re2 + bb(cov_xy) * im2
    uim = bb(cov_yx) * re2 + bb(cov_yy) * im2
    return jnp.stack([ure, uim], axis=-1) + mean


if __name__ == "__main__":
    key = jax.random.PRNGKey(0)
    k1, k2, k3 = jax.random.split(key, 3)
    B, S, H, W = 2, 4, 16, 16
    x = jax.random.normal(k1, (B, S, H, W, 2), dtype=jnp.float32)
    conv_w = 0.1 * jax.random.normal(k2, (2, 2, 3, 3), dtype=jnp.float32)  # OIHW
    conv_b = 0.1 * jax.random.normal(k3, (2,), dtype=jnp.float32)

    out = jax.jit(complex_norm_wrapper_forward)(x, conv_w, conv_b)
    out = jax.block_until_ready(out)

    ref = reference_forward(x, conv_w, conv_b)
    assert out.shape == ref.shape == (B, S, H, W, 2)
    err = float(jnp.max(jnp.abs(out - ref)))
    if not err < 2e-3:
        raise AssertionError(f"mismatch vs reference: max abs err = {err}")
    print("KERNEL_OK")
</pallas_src>

<mosaic_0001>
module attributes {stable_mosaic.version = 11 : i64} {
  func.func @_stats_kernel(%arg0: i32, %arg1: i32, %arg2: i32, %arg3: memref<1x4x512xf32, #tpu.memory_space<vmem>>, %arg4: memref<1x1x1xf32, #tpu.memory_space<vmem>>, %arg5: memref<1x1x1xf32, #tpu.memory_space<vmem>>, %arg6: memref<1x1x1xf32, #tpu.memory_space<vmem>>, %arg7: memref<1x1x1xf32, #tpu.memory_space<vmem>>, %arg8: memref<1x1x1xf32, #tpu.memory_space<vmem>>, %arg9: memref<8x512xf32, #tpu.memory_space<vmem>>) attributes {dimension_semantics = [#tpu.dimension_semantics<parallel>, #tpu.dimension_semantics<arbitrary>, #tpu.dimension_semantics<arbitrary>], iteration_bounds = array<i64: 2, 1, 1>, scalar_prefetch = 0 : i64, scratch_operands = 1 : i64, tpu.core_type = #tpu.core_type<tc>, window_params = [{transform_indices = @transform_0, window_bounds = array<i64: 1, 4, 512>}, {transform_indices = @transform_1, window_bounds = array<i64: 1, 1, 1>}, {transform_indices = @transform_2, window_bounds = array<i64: 1, 1, 1>}, {transform_indices = @transform_3, window_bounds = array<i64: 1, 1, 1>}, {transform_indices = @transform_4, window_bounds = array<i64: 1, 1, 1>}, {transform_indices = @transform_5, window_bounds = array<i64: 1, 1, 1>}]} {
    %c0_i32 = arith.constant 0 : i32
    %0 = arith.cmpi eq, %arg1, %c0_i32 : i32
    %c0_i32_0 = arith.constant 0 : i32
    %1 = arith.cmpi eq, %arg2, %c0_i32_0 : i32
    %2 = arith.andi %0, %1 : i1
    %c0_i32_1 = arith.constant 0 : i32
    %3 = arith.cmpi eq, %arg1, %c0_i32_1 : i32
    %c0_i32_2 = arith.constant 0 : i32
    %4 = arith.cmpi eq, %arg2, %c0_i32_2 : i32
    %5 = arith.andi %3, %4 : i1
    %c0 = arith.constant 0 : index
    %c0_3 = arith.constant 0 : index
    %c0_4 = arith.constant 0 : index
    %6 = vector.load %arg3[%c0, %c0_3, %c0_4] : memref<1x4x512xf32, #tpu.memory_space<vmem>>, vector<1x4x512xf32>
    %7 = vector.shape_cast %6 : vector<1x4x512xf32> to vector<4x512xf32>
    %8 = tpu.iota {dimensions = array<i32: 1>} : vector<1x512xi32>
    %c1_i32 = arith.constant 1 : i32
    %9 = vector.broadcast %c1_i32 : i32 to vector<1x512xi32>
    %10 = arith.andi %8, %9 : vector<1x512xi32>
    %c0_i32_5 = arith.constant 0 : i32
    %11 = vector.broadcast %c0_i32_5 : i32 to vector<1x512xi32>
    %12 = arith.cmpi eq, %10, %11 : vector<1x512xi32>
    %13 = arith.mulf %7, %7 : vector<4x512xf32>
    %c511_i32 = arith.constant 511 : i32
    %14 = tpu.dynamic_rotate %7 by %c511_i32 dim 1 : vector<4x512xf32>, i32 -> vector<4x512xf32>
    %15 = arith.mulf %7, %14 : vector<4x512xf32>
    %cst = arith.constant 0.000000e+00 : f32
    %16 = vector.shape_cast %12 : vector<1x512xi1> to vector<1x512xi1>
    %17 = vector.broadcast %16 : vector<1x512xi1> to vector<4x512xi1>
    %18 = vector.broadcast %cst : f32 to vector<4x512xf32>
    %19 = arith.select %17, %15, %18 : vector<4x512xi1>, vector<4x512xf32>
    %cst_6 = arith.constant 0.000000e+00 : f32
    %20 = vector.shape_cast %12 : vector<1x512xi1> to vector<1x512xi1>
    %21 = vector.broadcast %20 : vector<1x512xi1> to vector<4x512xi1>
    %22 = vector.broadcast %cst_6 : f32 to vector<4x512xf32>
    %23 = arith.select %21, %7, %22 : vector<4x512xi1>, vector<4x512xf32>
    %cst_7 = arith.constant 0.000000e+00 : f32
    %24 = vector.shape_cast %12 : vector<1x512xi1> to vector<1x512xi1>
    %25 = vector.broadcast %24 : vector<1x512xi1> to vector<4x512xi1>
    %26 = vector.broadcast %cst_7 : f32 to vector<4x512xf32>
    %27 = arith.select %25, %13, %26 : vector<4x512xi1>, vector<4x512xf32>
    %28 = arith.extui %2 : i1 to i32
    %c0_i32_8 = arith.constant 0 : i32
    %29 = arith.cmpi ne, %28, %c0_i32_8 : i32
    scf.if %29 {
      %cst_31 = arith.constant 0.000000e+00 : f32
      %57 = vector.broadcast %cst_31 : f32 to vector<8x512xf32>
      %c0_32 = arith.constant 0 : index
      %c0_33 = arith.constant 0 : index
      %58 = vector.load %arg9[%c0_32, %c0_33] : memref<8x512xf32, #tpu.memory_space<vmem>>, vector<8x512xf32>
      tpu.vector_store %arg9[%c0_32, %c0_33], %57 {strides = array<i32>} : memref<8x512xf32, #tpu.memory_space<vmem>>, vector<8x512xf32>,
    } else {
    }
    %c0_9 = arith.constant 0 : index
    %c0_10 = arith.constant 0 : index
    %30 = vector.load %arg9[%c0_9, %c0_10] : memref<8x512xf32, #tpu.memory_space<vmem>>, vector<1x512xf32>
    %cst_11 = arith.constant dense<0.000000e+00> : vector<512xf32>
    %31 = vector.multi_reduction <add>, %23, %cst_11 [0] : vector<4x512xf32> to vector<512xf32>
    %32 = vector.shape_cast %31 : vector<512xf32> to vector<1x512xf32>
    %33 = arith.addf %30, %32 : vector<1x512xf32>
    %c0_12 = arith.constant 0 : index
    %c0_13 = arith.constant 0 : index
    %34 = vector.load %arg9[%c0_12, %c0_13] : memref<8x512xf32, #tpu.memory_space<vmem>>, vector<1x512xf32>
    tpu.vector_store %arg9[%c0_12, %c0_13], %33 {strides = array<i32>} : memref<8x512xf32, #tpu.memory_space<vmem>>, vector<1x512xf32>,
    %c1 = arith.constant 1 : index
    %c0_14 = arith.constant 0 : index
    %35 = vector.load %arg9[%c1, %c0_14] : memref<8x512xf32, #tpu.memory_space<vmem>>, vector<1x512xf32>
    %cst_15 = arith.constant dense<0.000000e+00> : vector<512xf32>
    %36 = vector.multi_reduction <add>, %7, %cst_15 [0] : vector<4x512xf32> to vector<512xf32>
    %37 = vector.shape_cast %36 : vector<512xf32> to vector<1x512xf32>
    %38 = arith.addf %35, %37 : vector<1x512xf32>
    %c1_16 = arith.constant 1 : index
    %c0_17 = arith.constant 0 : index
    %39 = vector.load %arg9[%c1_16, %c0_17] : memref<8x512xf32, #tpu.memory_space<vmem>>, vector<1x512xf32>
    tpu.vector_store %arg9[%c1_16, %c0_17], %38 {strides = array<i32>} : memref<8x512xf32, #tpu.memory_space<vmem>>, vector<1x512xf32>,
    %c2 = arith.constant 2 : index
    %c0_18 = arith.constant 0 : index
    %40 = vector.load %arg9[%c2, %c0_18] : memref<8x512xf32, #tpu.memory_space<vmem>>, vector<1x512xf32>
    %cst_19 = arith.constant dense<0.000000e+00> : vector<512xf32>
    %41 = vector.multi_reduction <add>, %27, %cst_19 [0] : vector<4x512xf32> to vector<512xf32>
    %42 = vector.shape_cast %41 : vector<512xf32> to vector<1x512xf32>
    %43 = arith.addf %40, %42 : vector<1x512xf32>
    %c2_20 = arith.constant 2 : index
    %c0_21 = arith.constant 0 : index
    %44 = vector.load %arg9[%c2_20, %c0_21] : memref<8x512xf32, #tpu.memory_space<vmem>>, vector<1x512xf32>
    tpu.vector_store %arg9[%c2_20, %c0_21], %43 {strides = array<i32>} : memref<8x512xf32, #tpu.memory_space<vmem>>, vector<1x512xf32>,
    %c3 = arith.constant 3 : index
    %c0_22 = arith.constant 0 : index
    %45 = vector.load %arg9[%c3, %c0_22] : memref<8x512xf32, #tpu.memory_space<vmem>>, vector<1x512xf32>
    %cst_23 = arith.constant dense<0.000000e+00> : vector<512xf32>
    %46 = vector.multi_reduction <add>, %13, %cst_23 [0] : vector<4x512xf32> to vector<512xf32>
    %47 = vector.shape_cast %46 : vector<512xf32> to vector<1x512xf32>
    %48 = arith.addf %45, %47 : vector<1x512xf32>
    %c3_24 = arith.constant 3 : index
    %c0_25 = arith.constant 0 : index
    %49 = vector.load %arg9[%c3_24, %c0_25] : memref<8x512xf32, #tpu.memory_space<vmem>>, vector<1x512xf32>
    tpu.vector_store %arg9[%c3_24, %c0_25], %48 {strides = array<i32>} : memref<8x512xf32, #tpu.memory_space<vmem>>, vector<1x512xf32>,
    %c4 = arith.constant 4 : index
    %c0_26 = arith.constant 0 : index
    %50 = vector.load %arg9[%c4, %c0_26] : memref<8x512xf32, #tpu.memory_space<vmem>>, vector<1x512xf32>
    %cst_27 = arith.constant dense<0.000000e+00> : vector<512xf32>
    %51 = vector.multi_reduction <add>, %19, %cst_27 [0] : vector<4x512xf32> to vector<512xf32>
    %52 = vector.shape_cast %51 : vector<512xf32> to vector<1x512xf32>
    %53 = arith.addf %50, %52 : vector<1x512xf32>
    %c4_28 = arith.constant 4 : index
    %c0_29 = arith.constant 0 : index
    %54 = vector.load %arg9[%c4_28, %c0_29] : memref<8x512xf32, #tpu.memory_space<vmem>>, vector<1x512xf32>
    tpu.vector_store %arg9[%c4_28, %c0_29], %53 {strides = array<i32>} : memref<8x512xf32, #tpu.memory_space<vmem>>, vector<1x512xf32>,
    %55 = arith.extui %5 : i1 to i32
    %c0_i32_30 = arith.constant 0 : i32
    %56 = arith.cmpi ne, %55, %c0_i32_30 : i32
    scf.if %56 {
      %c0_31 = arith.constant 0 : index
      %c0_32 = arith.constant 0 : index
      %57 = vector.load %arg9[%c0_31, %c0_32] : memref<8x512xf32, #tpu.memory_space<vmem>>, vector<1x512xf32>
      %58 = vector.shape_cast %57 : vector<1x512xf32> to vector<1x1x512xf32>
      %cst_33 = arith.constant dense<0.000000e+00> : vector<1xf32>
      %59 = vector.multi_reduction <add>, %58, %cst_33 [1, 2] : vector<1x1x512xf32> to vector<1xf32>
      %60 = vector.shape_cast %59 : vector<1xf32> to vector<1x1x1xf32>
      %61 = vector.extract %60[0, 0, 0] : f32 from vector<1x1x1xf32>
      %c1_34 = arith.constant 1 : index
      %c0_35 = arith.constant 0 : index
      %62 = vector.load %arg9[%c1_34, %c0_35] : memref<8x512xf32, #tpu.memory_space<vmem>>, vector<1x512xf32>
      %63 = vector.shape_cast %62 : vector<1x512xf32> to vector<1x1x512xf32>
      %cst_36 = arith.constant dense<0.000000e+00> : vector<1xf32>
      %64 = vector.multi_reduction <add>, %63, %cst_36 [1, 2] : vector<1x1x512xf32> to vector<1xf32>
      %65 = vector.shape_cast %64 : vector<1xf32> to vector<1x1x1xf32>
      %66 = vector.extract %65[0, 0, 0] : f32 from vector<1x1x1xf32>
      %c2_37 = arith.constant 2 : index
      %c0_38 = arith.constant 0 : index
      %67 = vector.load %arg9[%c2_37, %c0_38] : memref<8x512xf32, #tpu.memory_space<vmem>>, vector<1x512xf32>
      %68 = vector.shape_cast %67 : vector<1x512xf32> to vector<1x1x512xf32>
      %cst_39 = arith.constant dense<0.000000e+00> : vector<1xf32>
      %69 = vector.multi_reduction <add>, %68, %cst_39 [1, 2] : vector<1x1x512xf32> to vector<1xf32>
      %70 = vector.shape_cast %69 : vector<1xf32> to vector<1x1x1xf32>
      %71 = vector.extract %70[0, 0, 0] : f32 from vector<1x1x1xf32>
      %c3_40 = arith.constant 3 : index
      %c0_41 = arith.constant 0 : index
      %72 = vector.load %arg9[%c3_40, %c0_41] : memref<8x512xf32, #tpu.memory_space<vmem>>, vector<1x512xf32>
      %73 = vector.shape_cast %72 : vector<1x512xf32> to vector<1x1x512xf32>
      %cst_42 = arith.constant dense<0.000000e+00> : vector<1xf32>
      %74 = vector.multi_reduction <add>, %73, %cst_42 [1, 2] : vector<1x1x512xf32> to vector<1xf32>
      %75 = vector.shape_cast %74 : vector<1xf32> to vector<1x1x1xf32>
      %76 = vector.extract %75[0, 0, 0] : f32 from vector<1x1x1xf32>
      %c4_43 = arith.constant 4 : index
      %c0_44 = arith.constant 0 : index
      %77 = vector.load %arg9[%c4_43, %c0_44] : memref<8x512xf32, #tpu.memory_space<vmem>>, vector<1x512xf32>
      %78 = vector.shape_cast %77 : vector<1x512xf32> to vector<1x1x512xf32>
      %cst_45 = arith.constant dense<0.000000e+00> : vector<1xf32>
      %79 = vector.multi_reduction <add>, %78, %cst_45 [1, 2] : vector<1x1x512xf32> to vector<1xf32>
      %80 = vector.shape_cast %79 : vector<1xf32> to vector<1x1x1xf32>
      %81 = vector.extract %80[0, 0, 0] : f32 from vector<1x1x1xf32>
      %cst_46 = arith.constant 0.000000e+00 : f32
      %82 = vector.broadcast %cst_46 : f32 to vector<1x1x1xf32>
      %83 = vector.broadcast %61 : f32 to vector<1x1x1xf32>
      %84 = arith.addf %82, %83 : vector<1x1x1xf32>
      %c0_47 = arith.constant 0 : index
      %c0_48 = arith.constant 0 : index
      %c0_49 = arith.constant 0 : index
      %85 = vector.load %arg4[%c0_47, %c0_48, %c0_49] : memref<1x1x1xf32, #tpu.memory_space<vmem>>, vector<1x1x1xf32>
      tpu.vector_store %arg4[%c0_47, %c0_48, %c0_49], %84 {strides = array<i32>} : memref<1x1x1xf32, #tpu.memory_space<vmem>>, vector<1x1x1xf32>,
      %cst_50 = arith.constant 0.000000e+00 : f32
      %86 = vector.broadcast %cst_50 : f32 to vector<1x1x1xf32>
      %87 = arith.subf %66, %61 : f32
      %88 = vector.broadcast %87 : f32 to vector<1x1x1xf32>
      %89 = arith.addf %86, %88 : vector<1x1x1xf32>
      %c0_51 = arith.constant 0 : index
      %c0_52 = arith.constant 0 : index
      %c0_53 = arith.constant 0 : index
      %90 = vector.load %arg5[%c0_51, %c0_52, %c0_53] : memref<1x1x1xf32, #tpu.memory_space<vmem>>, vector<1x1x1xf32>
      tpu.vector_store %arg5[%c0_51, %c0_52, %c0_53], %89 {strides = array<i32>} : memref<1x1x1xf32, #tpu.memory_space<vmem>>, vector<1x1x1xf32>,
      %cst_54 = arith.constant 0.000000e+00 : f32
      %91 = vector.broadcast %cst_54 : f32 to vector<1x1x1xf32>
      %92 = vector.broadcast %71 : f32 to vector<1x1x1xf32>
      %93 = arith.addf %91, %92 : vector<1x1x1xf32>
      %c0_55 = arith.constant 0 : index
      %c0_56 = arith.constant 0 : index
      %c0_57 = arith.constant 0 : index
      %94 = vector.load %arg6[%c0_55, %c0_56, %c0_57] : memref<1x1x1xf32, #tpu.memory_space<vmem>>, vector<1x1x1xf32>
      tpu.vector_store %arg6[%c0_55, %c0_56, %c0_57], %93 {strides = array<i32>} : memref<1x1x1xf32, #tpu.memory_space<vmem>>, vector<1x1x1xf32>,
      %cst_58 = arith.constant 0.000000e+00 : f32
      %95 = vector.broadcast %cst_58 : f32 to vector<1x1x1xf32>
      %96 = arith.subf %76, %71 : f32
      %97 = vector.broadcast %96 : f32 to vector<1x1x1xf32>
      %98 = arith.addf %95, %97 : vector<1x1x1xf32>
      %c0_59 = arith.constant 0 : index
      %c0_60 = arith.constant 0 : index
      %c0_61 = arith.constant 0 : index
      %99 = vector.load %arg7[%c0_59, %c0_60, %c0_61] : memref<1x1x1xf32, #tpu.memory_space<vmem>>, vector<1x1x1xf32>
      tpu.vector_store %arg7[%c0_59, %c0_60, %c0_61], %98 {strides = array<i32>} : memref<1x1x1xf32, #tpu.memory_space<vmem>>, vector<1x1x1xf32>,
      %cst_62 = arith.constant 0.000000e+00 : f32
      %100 = vector.broadcast %cst_62 : f32 to vector<1x1x1xf32>
      %101 = vector.broadcast %81 : f32 to vector<1x1x1xf32>
      %102 = arith.addf %100, %101 : vector<1x1x1xf32>
      %c0_63 = arith.constant 0 : index
      %c0_64 = arith.constant 0 : index
      %c0_65 = arith.constant 0 : index
      %103 = vector.load %arg8[%c0_63, %c0_64, %c0_65] : memref<1x1x1xf32, #tpu.memory_space<vmem>>, vector<1x1x1xf32>
      tpu.vector_store %arg8[%c0_63, %c0_64, %c0_65], %102 {strides = array<i32>} : memref<1x1x1xf32, #tpu.memory_space<vmem>>, vector<1x1x1xf32>,
    } else {
    }
    return
  }
  func.func @transform_0(%arg0: i32, %arg1: i32, %arg2: i32) -> (i32, i32, i32) {
    %c0_i32 = arith.constant 0 : i32
    return %arg0, %arg1, %arg2 : i32, i32, i32
  }
  func.func @transform_1(%arg0: i32, %arg1: i32, %arg2: i32) -> (i32, i32, i32) {
    %c0_i32 = arith.constant 0 : i32
    %c0_i32_0 = arith.constant 0 : i32
    %c0_i32_1 = arith.constant 0 : i32
    return %arg0, %c0_i32, %c0_i32_0 : i32, i32, i32
  }
  func.func @transform_2(%arg0: i32, %arg1: i32, %arg2: i32) -> (i32, i32, i32) {
    %c0_i32 = arith.constant 0 : i32
    %c0_i32_0 = arith.constant 0 : i32
    %c0_i32_1 = arith.constant 0 : i32
    return %arg0, %c0_i32, %c0_i32_0 : i32, i32, i32
  }
  func.func @transform_3(%arg0: i32, %arg1: i32, %arg2: i32) -> (i32, i32, i32) {
    %c0_i32 = arith.constant 0 : i32
    %c0_i32_0 = arith.constant 0 : i32
    %c0_i32_1 = arith.constant 0 : i32
    return %arg0, %c0_i32, %c0_i32_0 : i32, i32, i32
  }
  func.func @transform_4(%arg0: i32, %arg1: i32, %arg2: i32) -> (i32, i32, i32) {
    %c0_i32 = arith.constant 0 : i32
    %c0_i32_0 = arith.constant 0 : i32
    %c0_i32_1 = arith.constant 0 : i32
    return %arg0, %c0_i32, %c0_i32_0 : i32, i32, i32
  }
  func.func @transform_5(%arg0: i32, %arg1: i32, %arg2: i32) -> (i32, i32, i32) {
    %c0_i32 = arith.constant 0 : i32
    %c0_i32_0 = arith.constant 0 : i32
    %c0_i32_1 = arith.constant 0 : i32
    return %arg0, %c0_i32, %c0_i32_0 : i32, i32, i32
  }
}

module attributes {stable_mosaic.version = 11 : i64} {
  func.func @_fused_norm_conv_kernel(%arg0: i32, %arg1: i32, %arg2: memref<88xf32, #tpu.memory_space<smem>>, %arg3: memref<1x4x512xf32, #tpu.memory_space<vmem>>, %arg4: memref<1x4x512xf32, #tpu.memory_space<vmem>>) attributes {dimension_semantics = [#tpu.dimension_semantics<parallel>, #tpu.dimension_semantics<parallel>], iteration_bounds = array<i64: 2, 1>, scalar_prefetch = 0 : i64, scratch_operands = 0 : i64, tpu.core_type = #tpu.core_type<tc>, window_params = [{transform_indices = @transform_0, window_bounds = array<i64: 88>}, {transform_indices = @transform_1, window_bounds = array<i64: 1, 4, 512>}, {transform_indices = @transform_2, window_bounds = array<i64: 1, 4, 512>}]} {
    %c44_i32 = arith.constant 44 : i32
    %0 = arith.muli %arg0, %c44_i32 : i32
    %c0_i32 = arith.constant 0 : i32
    %1 = arith.addi %0, %c0_i32 : i32
    %2 = arith.index_cast %1 : i32 to index
    %3 = memref.load %arg2[%2] : memref<88xf32, #tpu.memory_space<smem>>
    %c1_i32 = arith.constant 1 : i32
    %4 = arith.addi %0, %c1_i32 : i32
    %5 = arith.index_cast %4 : i32 to index
    %6 = memref.load %arg2[%5] : memref<88xf32, #tpu.memory_space<smem>>
    %c2_i32 = arith.constant 2 : i32
    %7 = arith.addi %0, %c2_i32 : i32
    %8 = arith.index_cast %7 : i32 to index
    %9 = memref.load %arg2[%8] : memref<88xf32, #tpu.memory_space<smem>>
    %c3_i32 = arith.constant 3 : i32
    %10 = arith.addi %0, %c3_i32 : i32
    %11 = arith.index_cast %10 : i32 to index
    %12 = memref.load %arg2[%11] : memref<88xf32, #tpu.memory_space<smem>>
    %c4_i32 = arith.constant 4 : i32
    %13 = arith.addi %0, %c4_i32 : i32
    %14 = arith.index_cast %13 : i32 to index
    %15 = memref.load %arg2[%14] : memref<88xf32, #tpu.memory_space<smem>>
    %c5_i32 = arith.constant 5 : i32
    %16 = arith.addi %0, %c5_i32 : i32
    %17 = arith.index_cast %16 : i32 to index
    %18 = memref.load %arg2[%17] : memref<88xf32, #tpu.memory_space<smem>>
    %c6_i32 = arith.constant 6 : i32
    %19 = arith.addi %0, %c6_i32 : i32
    %c0_i32_0 = arith.constant 0 : i32
    %20 = arith.addi %19, %c0_i32_0 : i32
    %c0_i32_1 = arith.constant 0 : i32
    %21 = arith.addi %20, %c0_i32_1 : i32
    %22 = arith.index_cast %21 : i32 to index
    %23 = memref.load %arg2[%22] : memref<88xf32, #tpu.memory_space<smem>>
    %c6_i32_2 = arith.constant 6 : i32
    %24 = arith.addi %0, %c6_i32_2 : i32
    %c0_i32_3 = arith.constant 0 : i32
    %25 = arith.addi %24, %c0_i32_3 : i32
    %c1_i32_4 = arith.constant 1 : i32
    %26 = arith.addi %25, %c1_i32_4 : i32
    %27 = arith.index_cast %26 : i32 to index
    %28 = memref.load %arg2[%27] : memref<88xf32, #tpu.memory_space<smem>>
    %c6_i32_5 = arith.constant 6 : i32
    %29 = arith.addi %0, %c6_i32_5 : i32
    %c0_i32_6 = arith.constant 0 : i32
    %30 = arith.addi %29, %c0_i32_6 : i32
    %c2_i32_7 = arith.constant 2 : i32
    %31 = arith.addi %30, %c2_i32_7 : i32
    %32 = arith.index_cast %31 : i32 to index
    %33 = memref.load %arg2[%32] : memref<88xf32, #tpu.memory_space<smem>>
    %c6_i32_8 = arith.constant 6 : i32
    %34 = arith.addi %0, %c6_i32_8 : i32
    %c0_i32_9 = arith.constant 0 : i32
    %35 = arith.addi %34, %c0_i32_9 : i32
    %c3_i32_10 = arith.constant 3 : i32
    %36 = arith.addi %35, %c3_i32_10 : i32
    %37 = arith.index_cast %36 : i32 to index
    %38 = memref.load %arg2[%37] : memref<88xf32, #tpu.memory_space<smem>>
    %c6_i32_11 = arith.constant 6 : i32
    %39 = arith.addi %0, %c6_i32_11 : i32
    %c0_i32_12 = arith.constant 0 : i32
    %40 = arith.addi %39, %c0_i32_12 : i32
    %c4_i32_13 = arith.constant 4 : i32
    %41 = arith.addi %40, %c4_i32_13 : i32
    %42 = arith.index_cast %41 : i32 to index
    %43 = memref.load %arg2[%42] : memref<88xf32, #tpu.memory_space<smem>>
    %c6_i32_14 = arith.constant 6 : i32
    %44 = arith.addi %0, %c6_i32_14 : i32
    %c0_i32_15 = arith.constant 0 : i32
    %45 = arith.addi %44, %c0_i32_15 : i32
    %c5_i32_16 = arith.constant 5 : i32
    %46 = arith.addi %45, %c5_i32_16 : i32
    %47 = arith.index_cast %46 : i32 to index
    %48 = memref.load %arg2[%47] : memref<88xf32, #tpu.memory_space<smem>>
    %c6_i32_17 = arith.constant 6 : i32
    %49 = arith.addi %0, %c6_i32_17 : i32
    %c0_i32_18 = arith.constant 0 : i32
    %50 = arith.addi %49, %c0_i32_18 : i32
    %c6_i32_19 = arith.constant 6 : i32
    %51 = arith.addi %50, %c6_i32_19 : i32
    %52 = arith.index_cast %51 : i32 to index
    %53 = memref.load %arg2[%52] : memref<88xf32, #tpu.memory_space<smem>>
    %c6_i32_20 = arith.constant 6 : i32
    %54 = arith.addi %0, %c6_i32_20 : i32
    %c0_i32_21 = arith.constant 0 : i32
    %55 = arith.addi %54, %c0_i32_21 : i32
    %c7_i32 = arith.constant 7 : i32
    %56 = arith.addi %55, %c7_i32 : i32
    %57 = arith.index_cast %56 : i32 to index
    %58 = memref.load %arg2[%57] : memref<88xf32, #tpu.memory_space<smem>>
    %c6_i32_22 = arith.constant 6 : i32
    %59 = arith.addi %0, %c6_i32_22 : i32
    %c0_i32_23 = arith.constant 0 : i32
    %60 = arith.addi %59, %c0_i32_23 : i32
    %c8_i32 = arith.constant 8 : i32
    %61 = arith.addi %60, %c8_i32 : i32
    %62 = arith.index_cast %61 : i32 to index
    %63 = memref.load %arg2[%62] : memref<88xf32, #tpu.memory_space<smem>>
    %c6_i32_24 = arith.constant 6 : i32
    %64 = arith.addi %0, %c6_i32_24 : i32
    %c9_i32 = arith.constant 9 : i32
    %65 = arith.addi %64, %c9_i32 : i32
    %c0_i32_25 = arith.constant 0 : i32
    %66 = arith.addi %65, %c0_i32_25 : i32
    %67 = arith.index_cast %66 : i32 to index
    %68 = memref.load %arg2[%67] : memref<88xf32, #tpu.memory_space<smem>>
    %c6_i32_26 = arith.constant 6 : i32
    %69 = arith.addi %0, %c6_i32_26 : i32
    %c9_i32_27 = arith.constant 9 : i32
    %70 = arith.addi %69, %c9_i32_27 : i32
    %c1_i32_28 = arith.constant 1 : i32
    %71 = arith.addi %70, %c1_i32_28 : i32
    %72 = arith.index_cast %71 : i32 to index
    %73 = memref.load %arg2[%72] : memref<88xf32, #tpu.memory_space<smem>>
    %c6_i32_29 = arith.constant 6 : i32
    %74 = arith.addi %0, %c6_i32_29 : i32
    %c9_i32_30 = arith.constant 9 : i32
    %75 = arith.addi %74, %c9_i32_30 : i32
    %c2_i32_31 = arith.constant 2 : i32
    %76 = arith.addi %75, %c2_i32_31 : i32
    %77 = arith.index_cast %76 : i32 to index
    %78 = memref.load %arg2[%77] : memref<88xf32, #tpu.memory_space<smem>>
    %c6_i32_32 = arith.constant 6 : i32
    %79 = arith.addi %0, %c6_i32_32 : i32
    %c9_i32_33 = arith.constant 9 : i32
    %80 = arith.addi %79, %c9_i32_33 : i32
    %c3_i32_34 = arith.constant 3 : i32
    %81 = arith.addi %80, %c3_i32_34 : i32
    %82 = arith.index_cast %81 : i32 to index
    %83 = memref.load %arg2[%82] : memref<88xf32, #tpu.memory_space<smem>>
    %c6_i32_35 = arith.constant 6 : i32
    %84 = arith.addi %0, %c6_i32_35 : i32
    %c9_i32_36 = arith.constant 9 : i32
    %85 = arith.addi %84, %c9_i32_36 : i32
    %c4_i32_37 = arith.constant 4 : i32
    %86 = arith.addi %85, %c4_i32_37 : i32
    %87 = arith.index_cast %86 : i32 to index
    %88 = memref.load %arg2[%87] : memref<88xf32, #tpu.memory_space<smem>>
    %c6_i32_38 = arith.constant 6 : i32
    %89 = arith.addi %0, %c6_i32_38 : i32
    %c9_i32_39 = arith.constant 9 : i32
    %90 = arith.addi %89, %c9_i32_39 : i32
    %c5_i32_40 = arith.constant 5 : i32
    %91 = arith.addi %90, %c5_i32_40 : i32
    %92 = arith.index_cast %91 : i32 to index
    %93 = memref.load %arg2[%92] : memref<88xf32, #tpu.memory_space<smem>>
    %c6_i32_41 = arith.constant 6 : i32
    %94 = arith.addi %0, %c6_i32_41 : i32
    %c9_i32_42 = arith.constant 9 : i32
    %95 = arith.addi %94, %c9_i32_42 : i32
    %c6_i32_43 = arith.constant 6 : i32
    %96 = arith.addi %95, %c6_i32_43 : i32
    %97 = arith.index_cast %96 : i32 to index
    %98 = memref.load %arg2[%97] : memref<88xf32, #tpu.memory_space<smem>>
    %c6_i32_44 = arith.constant 6 : i32
    %99 = arith.addi %0, %c6_i32_44 : i32
    %c9_i32_45 = arith.constant 9 : i32
    %100 = arith.addi %99, %c9_i32_45 : i32
    %c7_i32_46 = arith.constant 7 : i32
    %101 = arith.addi %100, %c7_i32_46 : i32
    %102 = arith.index_cast %101 : i32 to index
    %103 = memref.load %arg2[%102] : memref<88xf32, #tpu.memory_space<smem>>
    %c6_i32_47 = arith.constant 6 : i32
    %104 = arith.addi %0, %c6_i32_47 : i32
    %c9_i32_48 = arith.constant 9 : i32
    %105 = arith.addi %104, %c9_i32_48 : i32
    %c8_i32_49 = arith.constant 8 : i32
    %106 = arith.addi %105, %c8_i32_49 : i32
    %107 = arith.index_cast %106 : i32 to index
    %108 = memref.load %arg2[%107] : memref<88xf32, #tpu.memory_space<smem>>
    %c6_i32_50 = arith.constant 6 : i32
    %109 = arith.addi %0, %c6_i32_50 : i32
    %c18_i32 = arith.constant 18 : i32
    %110 = arith.addi %109, %c18_i32 : i32
    %c0_i32_51 = arith.constant 0 : i32
    %111 = arith.addi %110, %c0_i32_51 : i32
    %112 = arith.index_cast %111 : i32 to index
    %113 = memref.load %arg2[%112] : memref<88xf32, #tpu.memory_space<smem>>
    %c6_i32_52 = arith.constant 6 : i32
    %114 = arith.addi %0, %c6_i32_52 : i32
    %c18_i32_53 = arith.constant 18 : i32
    %115 = arith.addi %114, %c18_i32_53 : i32
    %c1_i32_54 = arith.constant 1 : i32
    %116 = arith.addi %115, %c1_i32_54 : i32
    %117 = arith.index_cast %116 : i32 to index
    %118 = memref.load %arg2[%117] : memref<88xf32, #tpu.memory_space<smem>>
    %c6_i32_55 = arith.constant 6 : i32
    %119 = arith.addi %0, %c6_i32_55 : i32
    %c18_i32_56 = arith.constant 18 : i32
    %120 = arith.addi %119, %c18_i32_56 : i32
    %c2_i32_57 = arith.constant 2 : i32
    %121 = arith.addi %120, %c2_i32_57 : i32
    %122 = arith.index_cast %121 : i32 to index
    %123 = memref.load %arg2[%122] : memref<88xf32, #tpu.memory_space<smem>>
    %c6_i32_58 = arith.constant 6 : i32
    %124 = arith.addi %0, %c6_i32_58 : i32
    %c18_i32_59 = arith.constant 18 : i32
    %125 = arith.addi %124, %c18_i32_59 : i32
    %c3_i32_60 = arith.constant 3 : i32
    %126 = arith.addi %125, %c3_i32_60 : i32
    %127 = arith.index_cast %126 : i32 to index
    %128 = memref.load %arg2[%127] : memref<88xf32, #tpu.memory_space<smem>>
    %c6_i32_61 = arith.constant 6 : i32
    %129 = arith.addi %0, %c6_i32_61 : i32
    %c18_i32_62 = arith.constant 18 : i32
    %130 = arith.addi %129, %c18_i32_62 : i32
    %c4_i32_63 = arith.constant 4 : i32
    %131 = arith.addi %130, %c4_i32_63 : i32
    %132 = arith.index_cast %131 : i32 to index
    %133 = memref.load %arg2[%132] : memref<88xf32, #tpu.memory_space<smem>>
    %c6_i32_64 = arith.constant 6 : i32
    %134 = arith.addi %0, %c6_i32_64 : i32
    %c18_i32_65 = arith.constant 18 : i32
    %135 = arith.addi %134, %c18_i32_65 : i32
    %c5_i32_66 = arith.constant 5 : i32
    %136 = arith.addi %135, %c5_i32_66 : i32
    %137 = arith.index_cast %136 : i32 to index
    %138 = memref.load %arg2[%137] : memref<88xf32, #tpu.memory_space<smem>>
    %c6_i32_67 = arith.constant 6 : i32
    %139 = arith.addi %0, %c6_i32_67 : i32
    %c18_i32_68 = arith.constant 18 : i32
    %140 = arith.addi %139, %c18_i32_68 : i32
    %c6_i32_69 = arith.constant 6 : i32
    %141 = arith.addi %140, %c6_i32_69 : i32
    %142 = arith.index_cast %141 : i32 to index
    %143 = memref.load %arg2[%142] : memref<88xf32, #tpu.memory_space<smem>>
    %c6_i32_70 = arith.constant 6 : i32
    %144 = arith.addi %0, %c6_i32_70 : i32
    %c18_i32_71 = arith.constant 18 : i32
    %145 = arith.addi %144, %c18_i32_71 : i32
    %c7_i32_72 = arith.constant 7 : i32
    %146 = arith.addi %145, %c7_i32_72 : i32
    %147 = arith.index_cast %146 : i32 to index
    %148 = memref.load %arg2[%147] : memref<88xf32, #tpu.memory_space<smem>>
    %c6_i32_73 = arith.constant 6 : i32
    %149 = arith.addi %0, %c6_i32_73 : i32
    %c18_i32_74 = arith.constant 18 : i32
    %150 = arith.addi %149, %c18_i32_74 : i32
    %c8_i32_75 = arith.constant 8 : i32
    %151 = arith.addi %150, %c8_i32_75 : i32
    %152 = arith.index_cast %151 : i32 to index
    %153 = memref.load %arg2[%152] : memref<88xf32, #tpu.memory_space<smem>>
    %c6_i32_76 = arith.constant 6 : i32
    %154 = arith.addi %0, %c6_i32_76 : i32
    %c27_i32 = arith.constant 27 : i32
    %155 = arith.addi %154, %c27_i32 : i32
    %c0_i32_77 = arith.constant 0 : i32
    %156 = arith.addi %155, %c0_i32_77 : i32
    %157 = arith.index_cast %156 : i32 to index
    %158 = memref.load %arg2[%157] : memref<88xf32, #tpu.memory_space<smem>>
    %c6_i32_78 = arith.constant 6 : i32
    %159 = arith.addi %0, %c6_i32_78 : i32
    %c27_i32_79 = arith.constant 27 : i32
    %160 = arith.addi %159, %c27_i32_79 : i32
    %c1_i32_80 = arith.constant 1 : i32
    %161 = arith.addi %160, %c1_i32_80 : i32
    %162 = arith.index_cast %161 : i32 to index
    %163 = memref.load %arg2[%162] : memref<88xf32, #tpu.memory_space<smem>>
    %c6_i32_81 = arith.constant 6 : i32
    %164 = arith.addi %0, %c6_i32_81 : i32
    %c27_i32_82 = arith.constant 27 : i32
    %165 = arith.addi %164, %c27_i32_82 : i32
    %c2_i32_83 = arith.constant 2 : i32
    %166 = arith.addi %165, %c2_i32_83 : i32
    %167 = arith.index_cast %166 : i32 to index
    %168 = memref.load %arg2[%167] : memref<88xf32, #tpu.memory_space<smem>>
    %c6_i32_84 = arith.constant 6 : i32
    %169 = arith.addi %0, %c6_i32_84 : i32
    %c27_i32_85 = arith.constant 27 : i32
    %170 = arith.addi %169, %c27_i32_85 : i32
    %c3_i32_86 = arith.constant 3 : i32
    %171 = arith.addi %170, %c3_i32_86 : i32
    %172 = arith.index_cast %171 : i32 to index
    %173 = memref.load %arg2[%172] : memref<88xf32, #tpu.memory_space<smem>>
    %c6_i32_87 = arith.constant 6 : i32
    %174 = arith.addi %0, %c6_i32_87 : i32
    %c27_i32_88 = arith.constant 27 : i32
    %175 = arith.addi %174, %c27_i32_88 : i32
    %c4_i32_89 = arith.constant 4 : i32
    %176 = arith.addi %175, %c4_i32_89 : i32
    %177 = arith.index_cast %176 : i32 to index
    %178 = memref.load %arg2[%177] : memref<88xf32, #tpu.memory_space<smem>>
    %c6_i32_90 = arith.constant 6 : i32
    %179 = arith.addi %0, %c6_i32_90 : i32
    %c27_i32_91 = arith.constant 27 : i32
    %180 = arith.addi %179, %c27_i32_91 : i32
    %c5_i32_92 = arith.constant 5 : i32
    %181 = arith.addi %180, %c5_i32_92 : i32
    %182 = arith.index_cast %181 : i32 to index
    %183 = memref.load %arg2[%182] : memref<88xf32, #tpu.memory_space<smem>>
    %c6_i32_93 = arith.constant 6 : i32
    %184 = arith.addi %0, %c6_i32_93 : i32
    %c27_i32_94 = arith.constant 27 : i32
    %185 = arith.addi %184, %c27_i32_94 : i32
    %c6_i32_95 = arith.constant 6 : i32
    %186 = arith.addi %185, %c6_i32_95 : i32
    %187 = arith.index_cast %186 : i32 to index
    %188 = memref.load %arg2[%187] : memref<88xf32, #tpu.memory_space<smem>>
    %c6_i32_96 = arith.constant 6 : i32
    %189 = arith.addi %0, %c6_i32_96 : i32
    %c27_i32_97 = arith.constant 27 : i32
    %190 = arith.addi %189, %c27_i32_97 : i32
    %c7_i32_98 = arith.constant 7 : i32
    %191 = arith.addi %190, %c7_i32_98 : i32
    %192 = arith.index_cast %191 : i32 to index
    %193 = memref.load %arg2[%192] : memref<88xf32, #tpu.memory_space<smem>>
    %c6_i32_99 = arith.constant 6 : i32
    %194 = arith.addi %0, %c6_i32_99 : i32
    %c27_i32_100 = arith.constant 27 : i32
    %195 = arith.addi %194, %c27_i32_100 : i32
    %c8_i32_101 = arith.constant 8 : i32
    %196 = arith.addi %195, %c8_i32_101 : i32
    %197 = arith.index_cast %196 : i32 to index
    %198 = memref.load %arg2[%197] : memref<88xf32, #tpu.memory_space<smem>>
    %c42_i32 = arith.constant 42 : i32
    %199 = arith.addi %0, %c42_i32 : i32
    %200 = arith.index_cast %199 : i32 to index
    %201 = memref.load %arg2[%200] : memref<88xf32, #tpu.memory_space<smem>>
    %c43_i32 = arith.constant 43 : i32
    %202 = arith.addi %0, %c43_i32 : i32
    %203 = arith.index_cast %202 : i32 to index
    %204 = memref.load %arg2[%203] : memref<88xf32, #tpu.memory_space<smem>>
    %c0 = arith.constant 0 : index
    %c0_102 = arith.constant 0 : index
    %c0_103 = arith.constant 0 : index
    %205 = vector.load %arg3[%c0, %c0_102, %c0_103] : memref<1x4x512xf32, #tpu.memory_space<vmem>>, vector<1x4x512xf32>
    %206 = vector.shape_cast %205 : vector<1x4x512xf32> to vector<4x512xf32>
    %207 = tpu.iota {dimensions = array<i32: 1>} : vector<1x512xi32>
    %c1_i32_104 = arith.constant 1 : i32
    %208 = vector.broadcast %c1_i32_104 : i32 to vector<1x512xi32>
    %209 = arith.andi %207, %208 : vector<1x512xi32>
    %c0_i32_105 = arith.constant 0 : i32
    %210 = vector.broadcast %c0_i32_105 : i32 to vector<1x512xi32>
    %211 = arith.cmpi eq, %209, %210 : vector<1x512xi32>
    %c32_i32 = arith.constant 32 : i32
    %c0_i32_106 = arith.constant 0 : i32
    %212 = arith.cmpi eq, %c32_i32, %c0_i32_106 : i32
    %c1_i32_107 = arith.constant 1 : i32
    %213 = arith.select %212, %c1_i32_107, %c32_i32 : i32
    %214 = vector.broadcast %213 : i32 to vector<1x512xi32>
    %215 = arith.remsi %207, %214 : vector<1x512xi32>
    %c0_i32_108 = arith.constant 0 : i32
    %216 = vector.broadcast %c0_i32_108 : i32 to vector<1x512xi32>
    %217 = arith.cmpi ne, %215, %216 : vector<1x512xi32>
    %c0_i32_109 = arith.constant 0 : i32
    %218 = vector.broadcast %c0_i32_109 : i32 to vector<1x512xi32>
    %219 = arith.cmpi slt, %215, %218 : vector<1x512xi32>
    %c0_i32_110 = arith.constant 0 : i32
    %220 = arith.cmpi slt, %213, %c0_i32_110 : i32
    %221 = vector.broadcast %220 : i1 to vector<1x512xi1>
    %222 = vector.broadcast %221 : vector<1x512xi1> to vector<1x512xi1>
    %223 = arith.xori %219, %222 : vector<1x512xi1>
    %224 = arith.andi %223, %217 : vector<1x512xi1>
    %225 = vector.broadcast %213 : i32 to vector<1x512xi32>
    %226 = arith.addi %215, %225 : vector<1x512xi32>
    %227 = arith.select %224, %226, %215 : vector<1x512xi1>, vector<1x512xi32>
    %228 = vector.broadcast %3 : f32 to vector<1x512xf32>
    %229 = vector.broadcast %6 : f32 to vector<1x512xf32>
    %230 = arith.select %211, %228, %229 : vector<1x512xi1>, vector<1x512xf32>
    %231 = vector.broadcast %9 : f32 to vector<1x512xf32>
    %232 = vector.broadcast %12 : f32 to vector<1x512xf32>
    %233 = arith.select %211, %231, %232 : vector<1x512xi1>, vector<1x512xf32>
    %234 = vector.broadcast %15 : f32 to vector<1x512xf32>
    %235 = vector.broadcast %18 : f32 to vector<1x512xf32>
    %236 = arith.select %211, %234, %235 : vector<1x512xi1>, vector<1x512xf32>
    %237 = vector.broadcast %201 : f32 to vector<1x512xf32>
    %238 = vector.broadcast %204 : f32 to vector<1x512xf32>
    %239 = arith.select %211, %237, %238 : vector<1x512xi1>, vector<1x512xf32>
    %240 = vector.broadcast %23 : f32 to vector<1x512xf32>
    %241 = vector.broadcast %158 : f32 to vector<1x512xf32>
    %242 = arith.select %211, %240, %241 : vector<1x512xi1>, vector<1x512xf32>
    %243 = vector.broadcast %28 : f32 to vector<1x512xf32>
    %244 = vector.broadcast %163 : f32 to vector<1x512xf32>
    %245 = arith.select %211, %243, %244 : vector<1x512xi1>, vector<1x512xf32>
    %246 = vector.broadcast %33 : f32 to vector<1x512xf32>
    %247 = vector.broadcast %168 : f32 to vector<1x512xf32>
    %248 = arith.select %211, %246, %247 : vector<1x512xi1>, vector<1x512xf32>
    %249 = vector.broadcast %38 : f32 to vector<1x512xf32>
    %250 = vector.broadcast %173 : f32 to vector<1x512xf32>
    %251 = arith.select %211, %249, %250 : vector<1x512xi1>, vector<1x512xf32>
    %252 = vector.broadcast %43 : f32 to vector<1x512xf32>
    %253 = vector.broadcast %178 : f32 to vector<1x512xf32>
    %254 = arith.select %211, %252, %253 : vector<1x512xi1>, vector<1x512xf32>
    %255 = vector.broadcast %48 : f32 to vector<1x512xf32>
    %256 = vector.broadcast %183 : f32 to vector<1x512xf32>
    %257 = arith.select %211, %255, %256 : vector<1x512xi1>, vector<1x512xf32>
    %258 = vector.broadcast %53 : f32 to vector<1x512xf32>
    %259 = vector.broadcast %188 : f32 to vector<1x512xf32>
    %260 = arith.select %211, %258, %259 : vector<1x512xi1>, vector<1x512xf32>
    %261 = vector.broadcast %58 : f32 to vector<1x512xf32>
    %262 = vector.broadcast %193 : f32 to vector<1x512xf32>
    %263 = arith.select %211, %261, %262 : vector<1x512xi1>, vector<1x512xf32>
    %264 = vector.broadcast %63 : f32 to vector<1x512xf32>
    %265 = vector.broadcast %198 : f32 to vector<1x512xf32>
    %266 = arith.select %211, %264, %265 : vector<1x512xi1>, vector<1x512xf32>
    %267 = vector.broadcast %68 : f32 to vector<1x512xf32>
    %268 = vector.broadcast %113 : f32 to vector<1x512xf32>
    %269 = arith.select %211, %267, %268 : vector<1x512xi1>, vector<1x512xf32>
    %270 = vector.broadcast %73 : f32 to vector<1x512xf32>
    %271 = vector.broadcast %118 : f32 to vector<1x512xf32>
    %272 = arith.select %211, %270, %271 : vector<1x512xi1>, vector<1x512xf32>
    %273 = vector.broadcast %78 : f32 to vector<1x512xf32>
    %274 = vector.broadcast %123 : f32 to vector<1x512xf32>
    %275 = arith.select %211, %273, %274 : vector<1x512xi1>, vector<1x512xf32>
    %276 = vector.broadcast %83 : f32 to vector<1x512xf32>
    %277 = vector.broadcast %128 : f32 to vector<1x512xf32>
    %278 = arith.select %211, %276, %277 : vector<1x512xi1>, vector<1x512xf32>
    %279 = vector.broadcast %88 : f32 to vector<1x512xf32>
    %280 = vector.broadcast %133 : f32 to vector<1x512xf32>
    %281 = arith.select %211, %279, %280 : vector<1x512xi1>, vector<1x512xf32>
    %282 = vector.broadcast %93 : f32 to vector<1x512xf32>
    %283 = vector.broadcast %138 : f32 to vector<1x512xf32>
    %284 = arith.select %211, %282, %283 : vector<1x512xi1>, vector<1x512xf32>
    %285 = vector.broadcast %98 : f32 to vector<1x512xf32>
    %286 = vector.broadcast %143 : f32 to vector<1x512xf32>
    %287 = arith.select %211, %285, %286 : vector<1x512xi1>, vector<1x512xf32>
    %288 = vector.broadcast %103 : f32 to vector<1x512xf32>
    %289 = vector.broadcast %148 : f32 to vector<1x512xf32>
    %290 = arith.select %211, %288, %289 : vector<1x512xi1>, vector<1x512xf32>
    %291 = vector.broadcast %108 : f32 to vector<1x512xf32>
    %292 = vector.broadcast %153 : f32 to vector<1x512xf32>
    %293 = arith.select %211, %291, %292 : vector<1x512xi1>, vector<1x512xf32>
    %c32_i32_111 = arith.constant 32 : i32
    %294 = vector.broadcast %c32_i32_111 : i32 to vector<1x512xi32>
    %295 = arith.cmpi sge, %207, %294 : vector<1x512xi32>
    %c480_i32 = arith.constant 480 : i32
    %296 = vector.broadcast %c480_i32 : i32 to vector<1x512xi32>
    %297 = arith.cmpi slt, %207, %296 : vector<1x512xi32>
    %c2_i32_112 = arith.constant 2 : i32
    %298 = vector.broadcast %c2_i32_112 : i32 to vector<1x512xi32>
    %299 = arith.cmpi sge, %227, %298 : vector<1x512xi32>
    %c30_i32 = arith.constant 30 : i32
    %300 = vector.broadcast %c30_i32 : i32 to vector<1x512xi32>
    %301 = arith.cmpi slt, %227, %300 : vector<1x512xi32>
    %c1_i32_113 = arith.constant 1 : i32
    %302 = tpu.dynamic_rotate %206 by %c1_i32_113 dim 1 : vector<4x512xf32>, i32 -> vector<4x512xf32>
    %c511_i32 = arith.constant 511 : i32
    %303 = tpu.dynamic_rotate %206 by %c511_i32 dim 1 : vector<4x512xf32>, i32 -> vector<4x512xf32>
    %304 = vector.shape_cast %211 : vector<1x512xi1> to vector<1x512xi1>
    %305 = vector.broadcast %304 : vector<1x512xi1> to vector<4x512xi1>
    %306 = arith.select %305, %303, %302 : vector<4x512xi1>, vector<4x512xf32>
    %307 = vector.broadcast %230 : vector<1x512xf32> to vector<4x512xf32>
    %308 = arith.mulf %307, %206 : vector<4x512xf32>
    %309 = vector.broadcast %233 : vector<1x512xf32> to vector<4x512xf32>
    %310 = arith.mulf %309, %306 : vector<4x512xf32>
    %311 = arith.addf %308, %310 : vector<4x512xf32>
    %312 = vector.broadcast %236 : vector<1x512xf32> to vector<4x512xf32>
    %313 = arith.addf %311, %312 : vector<4x512xf32>
    %cst = arith.constant -6.000000e+00 : f32
    %cst_114 = arith.constant 6.000000e+00 : f32
    %314 = vector.broadcast %cst : f32 to vector<4x512xf32>
    %315 = arith.maximumf %314, %313 : vector<4x512xf32>
    %316 = vector.broadcast %cst_114 : f32 to vector<4x512xf32>
    %317 = arith.minimumf %316, %315 : vector<4x512xf32>
    %c1_i32_115 = arith.constant 1 : i32
    %318 = tpu.dynamic_rotate %317 by %c1_i32_115 dim 1 : vector<4x512xf32>, i32 -> vector<4x512xf32>
    %c511_i32_116 = arith.constant 511 : i32
    %319 = tpu.dynamic_rotate %317 by %c511_i32_116 dim 1 : vector<4x512xf32>, i32 -> vector<4x512xf32>
    %320 = vector.shape_cast %211 : vector<1x512xi1> to vector<1x512xi1>
    %321 = vector.broadcast %320 : vector<1x512xi1> to vector<4x512xi1>
    %322 = arith.select %321, %319, %318 : vector<4x512xi1>, vector<4x512xf32>
    %323 = vector.broadcast %254 : vector<1x512xf32> to vector<4x512xf32>
    %324 = arith.mulf %323, %317 : vector<4x512xf32>
    %325 = vector.broadcast %281 : vector<1x512xf32> to vector<4x512xf32>
    %326 = arith.mulf %325, %322 : vector<4x512xf32>
    %327 = arith.addf %324, %326 : vector<4x512xf32>
    %c34_i32 = arith.constant 34 : i32
    %328 = tpu.dynamic_rotate %317 by %c34_i32 dim 1 : vector<4x512xf32>, i32 -> vector<4x512xf32>
    %c34_i32_117 = arith.constant 34 : i32
    %329 = tpu.dynamic_rotate %322 by %c34_i32_117 dim 1 : vector<4x512xf32>, i32 -> vector<4x512xf32>
    %330 = arith.andi %295, %299 : vector<1x512xi1>
    %331 = vector.broadcast %242 : vector<1x512xf32> to vector<4x512xf32>
    %332 = arith.mulf %331, %328 : vector<4x512xf32>
    %333 = vector.broadcast %269 : vector<1x512xf32> to vector<4x512xf32>
    %334 = arith.mulf %333, %329 : vector<4x512xf32>
    %335 = arith.addf %332, %334 : vector<4x512xf32>
    %cst_118 = arith.constant 0.000000e+00 : f32
    %336 = vector.shape_cast %330 : vector<1x512xi1> to vector<1x512xi1>
    %337 = vector.broadcast %336 : vector<1x512xi1> to vector<4x512xi1>
    %338 = vector.broadcast %cst_118 : f32 to vector<4x512xf32>
    %339 = arith.select %337, %335, %338 : vector<4x512xi1>, vector<4x512xf32>
    %340 = arith.addf %327, %339 : vector<4x512xf32>
    %c32_i32_119 = arith.constant 32 : i32
    %341 = tpu.dynamic_rotate %317 by %c32_i32_119 dim 1 : vector<4x512xf32>, i32 -> vector<4x512xf32>
    %c32_i32_120 = arith.constant 32 : i32
    %342 = tpu.dynamic_rotate %322 by %c32_i32_120 dim 1 : vector<4x512xf32>, i32 -> vector<4x512xf32>
    %343 = vector.broadcast %245 : vector<1x512xf32> to vector<4x512xf32>
    %344 = arith.mulf %343, %341 : vector<4x512xf32>
    %345 = vector.broadcast %272 : vector<1x512xf32> to vector<4x512xf32>
    %346 = arith.mulf %345, %342 : vector<4x512xf32>
    %347 = arith.addf %344, %346 : vector<4x512xf32>
    %cst_121 = arith.constant 0.000000e+00 : f32
    %348 = vector.shape_cast %295 : vector<1x512xi1> to vector<1x512xi1>
    %349 = vector.broadcast %348 : vector<1x512xi1> to vector<4x512xi1>
    %350 = vector.broadcast %cst_121 : f32 to vector<4x512xf32>
    %351 = arith.select %349, %347, %350 : vector<4x512xi1>, vector<4x512xf32>
    %352 = arith.addf %340, %351 : vector<4x512xf32>
    %c30_i32_122 = arith.constant 30 : i32
    %353 = tpu.dynamic_rotate %317 by %c30_i32_122 dim 1 : vector<4x512xf32>, i32 -> vector<4x512xf32>
    %c30_i32_123 = arith.constant 30 : i32
    %354 = tpu.dynamic_rotate %322 by %c30_i32_123 dim 1 : vector<4x512xf32>, i32 -> vector<4x512xf32>
    %355 = arith.andi %295, %301 : vector<1x512xi1>
    %356 = vector.broadcast %248 : vector<1x512xf32> to vector<4x512xf32>
    %357 = arith.mulf %356, %353 : vector<4x512xf32>
    %358 = vector.broadcast %275 : vector<1x512xf32> to vector<4x512xf32>
    %359 = arith.mulf %358, %354 : vector<4x512xf32>
    %360 = arith.addf %357, %359 : vector<4x512xf32>
    %cst_124 = arith.constant 0.000000e+00 : f32
    %361 = vector.shape_cast %355 : vector<1x512xi1> to vector<1x512xi1>
    %362 = vector.broadcast %361 : vector<1x512xi1> to vector<4x512xi1>
    %363 = vector.broadcast %cst_124 : f32 to vector<4x512xf32>
    %364 = arith.select %362, %360, %363 : vector<4x512xi1>, vector<4x512xf32>
    %365 = arith.addf %352, %364 : vector<4x512xf32>
    %c2_i32_125 = arith.constant 2 : i32
    %366 = tpu.dynamic_rotate %317 by %c2_i32_125 dim 1 : vector<4x512xf32>, i32 -> vector<4x512xf32>
    %c2_i32_126 = arith.constant 2 : i32
    %367 = tpu.dynamic_rotate %322 by %c2_i32_126 dim 1 : vector<4x512xf32>, i32 -> vector<4x512xf32>
    %368 = vector.broadcast %251 : vector<1x512xf32> to vector<4x512xf32>
    %369 = arith.mulf %368, %366 : vector<4x512xf32>
    %370 = vector.broadcast %278 : vector<1x512xf32> to vector<4x512xf32>
    %371 = arith.mulf %370, %367 : vector<4x512xf32>
    %372 = arith.addf %369, %371 : vector<4x512xf32>
    %cst_127 = arith.constant 0.000000e+00 : f32
    %373 = vector.shape_cast %299 : vector<1x512xi1> to vector<1x512xi1>
    %374 = vector.broadcast %373 : vector<1x512xi1> to vector<4x512xi1>
    %375 = vector.broadcast %cst_127 : f32 to vector<4x512xf32>
    %376 = arith.select %374, %372, %375 : vector<4x512xi1>, vector<4x512xf32>
    %377 = arith.addf %365, %376 : vector<4x512xf32>
    %c510_i32 = arith.constant 510 : i32
    %378 = tpu.dynamic_rotate %317 by %c510_i32 dim 1 : vector<4x512xf32>, i32 -> vector<4x512xf32>
    %c510_i32_128 = arith.constant 510 : i32
    %379 = tpu.dynamic_rotate %322 by %c510_i32_128 dim 1 : vector<4x512xf32>, i32 -> vector<4x512xf32>
    %380 = vector.broadcast %257 : vector<1x512xf32> to vector<4x512xf32>
    %381 = arith.mulf %380, %378 : vector<4x512xf32>
    %382 = vector.broadcast %284 : vector<1x512xf32> to vector<4x512xf32>
    %383 = arith.mulf %382, %379 : vector<4x512xf32>
    %384 = arith.addf %381, %383 : vector<4x512xf32>
    %cst_129 = arith.constant 0.000000e+00 : f32
    %385 = vector.shape_cast %301 : vector<1x512xi1> to vector<1x512xi1>
    %386 = vector.broadcast %385 : vector<1x512xi1> to vector<4x512xi1>
    %387 = vector.broadcast %cst_129 : f32 to vector<4x512xf32>
    %388 = arith.select %386, %384, %387 : vector<4x512xi1>, vector<4x512xf32>
    %389 = arith.addf %377, %388 : vector<4x512xf32>
    %c482_i32 = arith.constant 482 : i32
    %390 = tpu.dynamic_rotate %317 by %c482_i32 dim 1 : vector<4x512xf32>, i32 -> vector<4x512xf32>
    %c482_i32_130 = arith.constant 482 : i32
    %391 = tpu.dynamic_rotate %322 by %c482_i32_130 dim 1 : vector<4x512xf32>, i32 -> vector<4x512xf32>
    %392 = arith.andi %297, %299 : vector<1x512xi1>
    %393 = vector.broadcast %260 : vector<1x512xf32> to vector<4x512xf32>
    %394 = arith.mulf %393, %390 : vector<4x512xf32>
    %395 = vector.broadcast %287 : vector<1x512xf32> to vector<4x512xf32>
    %396 = arith.mulf %395, %391 : vector<4x512xf32>
    %397 = arith.addf %394, %396 : vector<4x512xf32>
    %cst_131 = arith.constant 0.000000e+00 : f32
    %398 = vector.shape_cast %392 : vector<1x512xi1> to vector<1x512xi1>
    %399 = vector.broadcast %398 : vector<1x512xi1> to vector<4x512xi1>
    %400 = vector.broadcast %cst_131 : f32 to vector<4x512xf32>
    %401 = arith.select %399, %397, %400 : vector<4x512xi1>, vector<4x512xf32>
    %402 = arith.addf %389, %401 : vector<4x512xf32>
    %c480_i32_132 = arith.constant 480 : i32
    %403 = tpu.dynamic_rotate %317 by %c480_i32_132 dim 1 : vector<4x512xf32>, i32 -> vector<4x512xf32>
    %c480_i32_133 = arith.constant 480 : i32
    %404 = tpu.dynamic_rotate %322 by %c480_i32_133 dim 1 : vector<4x512xf32>, i32 -> vector<4x512xf32>
    %405 = vector.broadcast %263 : vector<1x512xf32> to vector<4x512xf32>
    %406 = arith.mulf %405, %403 : vector<4x512xf32>
    %407 = vector.broadcast %290 : vector<1x512xf32> to vector<4x512xf32>
    %408 = arith.mulf %407, %404 : vector<4x512xf32>
    %409 = arith.addf %406, %408 : vector<4x512xf32>
    %cst_134 = arith.constant 0.000000e+00 : f32
    %410 = vector.shape_cast %297 : vector<1x512xi1> to vector<1x512xi1>
    %411 = vector.broadcast %410 : vector<1x512xi1> to vector<4x512xi1>
    %412 = vector.broadcast %cst_134 : f32 to vector<4x512xf32>
    %413 = arith.select %411, %409, %412 : vector<4x512xi1>, vector<4x512xf32>
    %414 = arith.addf %402, %413 : vector<4x512xf32>
    %c478_i32 = arith.constant 478 : i32
    %415 = tpu.dynamic_rotate %317 by %c478_i32 dim 1 : vector<4x512xf32>, i32 -> vector<4x512xf32>
    %c478_i32_135 = arith.constant 478 : i32
    %416 = tpu.dynamic_rotate %322 by %c478_i32_135 dim 1 : vector<4x512xf32>, i32 -> vector<4x512xf32>
    %417 = arith.andi %297, %301 : vector<1x512xi1>
    %418 = vector.broadcast %266 : vector<1x512xf32> to vector<4x512xf32>
    %419 = arith.mulf %418, %415 : vector<4x512xf32>
    %420 = vector.broadcast %293 : vector<1x512xf32> to vector<4x512xf32>
    %421 = arith.mulf %420, %416 : vector<4x512xf32>
    %422 = arith.addf %419, %421 : vector<4x512xf32>
    %cst_136 = arith.constant 0.000000e+00 : f32
    %423 = vector.shape_cast %417 : vector<1x512xi1> to vector<1x512xi1>
    %424 = vector.broadcast %423 : vector<1x512xi1> to vector<4x512xi1>
    %425 = vector.broadcast %cst_136 : f32 to vector<4x512xf32>
    %426 = arith.select %424, %422, %425 : vector<4x512xi1>, vector<4x512xf32>
    %427 = arith.addf %414, %426 : vector<4x512xf32>
    %428 = vector.broadcast %239 : vector<1x512xf32> to vector<4x512xf32>
    %429 = arith.addf %427, %428 : vector<4x512xf32>
    %c0_137 = arith.constant 0 : index
    %c0_138 = arith.constant 0 : index
    %c0_139 = arith.constant 0 : index
    %430 = vector.load %arg4[%c0_137, %c0_138, %c0_139] : memref<1x4x512xf32, #tpu.memory_space<vmem>>, vector<1x4x512xf32>
    %431 = vector.shape_cast %430 : vector<1x4x512xf32> to vector<4x512xf32>
    %432 = vector.shape_cast %429 : vector<4x512xf32> to vector<1x4x512xf32>
    tpu.vector_store %arg4[%c0_137, %c0_138, %c0_139], %432 {strides = array<i32>} : memref<1x4x512xf32, #tpu.memory_space<vmem>>, vector<1x4x512xf32>,
    return
  }
  func.func @transform_0(%arg0: i32, %arg1: i32) -> i32 {
    %c0_i32 = arith.constant 0 : i32
    %c0_i32_0 = arith.constant 0 : i32
    return %c0_i32 : i32
  }
  func.func @transform_1(%arg0: i32, %arg1: i32) -> (i32, i32, i32) {
    %c0_i32 = arith.constant 0 : i32
    %c0_i32_0 = arith.constant 0 : i32
    return %arg0, %arg1, %c0_i32 : i32, i32, i32
  }
  func.func @transform_2(%arg0: i32, %arg1: i32) -> (i32, i32, i32) {
    %c0_i32 = arith.constant 0 : i32
    %c0_i32_0 = arith.constant 0 : i32
    return %arg0, %arg1, %c0_i32 : i32, i32, i32
  }
}

</mosaic_0001>

<llo_original>
// kernel: complex_norm_wrapper_forward.2
$region0: #{complex_norm_wrapper_forward.2}
  #allocation0 [shape = 'u32[]', space=smem, size = 0x4, offset = 0x4, fixed_abs, tag = 'smem constant byte address 0x4 - core index']
  #allocation1 [shape = 'u32[144,128]{1,0:T(1,128)}', space=vmem, size = 0x12000, scoped, tag = 'internal scratch']
  #allocation2 [shape = 'f32[8,512]{1,0:T(8,128)}', space=vmem, size = 0x4000, scoped, tag = 'scratch operand']
  %s0 = inlined_call_operand.vmem [shape: f32[2,4,512], index: 0, kind: input, shape index: {}]
  %s1 = inlined_call_operand.vmem [shape: f32[2,1,1], index: 1, kind: output, shape index: {0}]
  %s2 = inlined_call_operand.vmem [shape: f32[2,1,1], index: 2, kind: output, shape index: {1}]
  %s3 = inlined_call_operand.vmem [shape: f32[2,1,1], index: 3, kind: output, shape index: {2}]
  %s4 = inlined_call_operand.vmem [shape: f32[2,1,1], index: 4, kind: output, shape index: {3}]
  %s5 = inlined_call_operand.vmem [shape: f32[2,1,1], index: 5, kind: output, shape index: {4}]
  %6 = xla_tuple %s1, %s2, %s3, %s4, %s5
  %s7 = sld [smem:[#allocation0]]
  $region77: #{complex_norm_wrapper_forward.2} parent=0
    _
  %s9 = ssub.s32 1, %s7
  %s10 = scalar_select 0, %s9, %s7
  loop: start=0, step=1, limit=4
  $region2: #{complex_norm_wrapper_forward.2} parent=0 // loop_pre_header
    _
  $region3: #{complex_norm_wrapper_forward.2} parent=0 // loop_header
    %s12 = sphi 0, %s16
    %p13 = scmp.ge.s32.totalorder %s12, 4
    %s19 = sphi 0, %s38
    %s20 = sphi 0, %s34
    %s21 = sphi 0, %s30
    %s22 = sphi 0, %s19
    %s23 = sphi 0, %s20
    %s24 = sphi 0, %s21
    %s25 = sphi 0, %s22
    %s26 = sphi 0, %s23
    %s27 = sphi 0, %s24
    %s45 = sphi 0, %s47
    %s48 = sphi 0, %s45
    %s49 = sphi 0, %s48
    %s65 = sphi 0, %s49
    %s71 = sphi 0, %s73
    %s74 = sphi 0, %s71
    %s75 = sphi 0, %s74
    %s91 = sphi 0, %s75
    %s97 = sphi 0, %s99
    %s100 = sphi 0, %s97
    %s101 = sphi 0, %s100
    %s117 = sphi 0, %s101
    %s123 = sphi 0, %s125
    %s126 = sphi 0, %s123
    %s127 = sphi 0, %s126
    %s143 = sphi 0, %s127
    %s149 = sphi 0, %s151
    %s152 = sphi 0, %s149
    %s153 = sphi 0, %s152
    %s169 = sphi 0, %s153
    %s175 = sphi 0, %s177
    %s178 = sphi 0, %s175
    %s179 = sphi 0, %s178
    %s195 = sphi 0, %s179
  $region4: #{complex_norm_wrapper_forward.2} parent=0 // loop_header_branch
    %15 = sbr.rel (%p13) target = $region8
  $region5: #{complex_norm_wrapper_forward.2} parent=0 // loop_body
    %s17 = ssub.s32 %s12, 1
    %s18 = ssub.s32 %s12, 2
    %s28 = sadd.s32 1, %s21
    %p29 = scmp.ge.s32.totalorder %s28, 1
    %s30 = scalar_select %p29, 0, %s28
    %s31 = sadd.s32 1, %s20
    %s32 = scalar_select %p29, %s31, %s20
    %p33 = scmp.ge.s32.totalorder %s32, 1
    %s34 = scalar_select %p33, 0, %s32
    %s35 = sadd.s32 1, %s19
    %s36 = scalar_select %p33, %s35, %s19
    %p37 = scmp.ge.s32.totalorder %s36, 2
    %s38 = scalar_select %p37, 0, %s36
    %s39 = ssub.s32 %s19, %s38
    %s40 = ssub.s32 %s20, %s34
    %s41 = sor.u32 %s39, %s40
    %s42 = ssub.s32 %s21, %s30
    %s43 = sor.u32 %s41, %s42
    %p44 = scmp.eq.s32.totalorder %s43, 0
    %s46 = sadd.s32 %s45, 1
    %s47 = scalar_select %p44, %s45, %s46
    %p50 = pneg %p44
    %p51 = scmp.eq.s32.totalorder %s12, 1
    %p52 = por %p50, %p51
    %p53 = scmp.ne.s32.totalorder %s45, %s48
    %p54 = scmp.eq.s32.totalorder %s12, 0
    %p55 = por %p53, %p54
    %p56 = scmp.ne.s32.totalorder %s45, %s48
    %p57 = scmp.eq.s32.totalorder %s17, 1
    %p58 = por %p56, %p57
    %p59 = scmp.ne.s32.totalorder %s48, %s49
    %p60 = scmp.eq.s32.totalorder %s17, 0
    %p61 = por %p59, %p60
    %p62 = scmp.ne.s32.totalorder %s48, %s49
    %p63 = scmp.eq.s32.totalorder %s18, 1
    %p64 = por %p62, %p63
    %p66 = scmp.ne.s32.totalorder %s49, %s65
    %p67 = scmp.eq.s32.totalorder %s18, 0
    %p68 = por %p66, %p67
    %s69 = ssub.s32 %s19, %s38
    %p70 = scmp.eq.s32.totalorder %s69, 0
    %s72 = sadd.s32 %s71, 1
    %s73 = scalar_select %p70, %s71, %s72
    %p76 = pneg %p70
    %p77 = scmp.eq.s32.totalorder %s12, 1
    %p78 = por %p76, %p77
    %p79 = scmp.ne.s32.totalorder %s71, %s74
    %p80 = scmp.eq.s32.totalorder %s12, 0
    %p81 = por %p79, %p80
    %p82 = scmp.ne.s32.totalorder %s71, %s74
    %p83 = scmp.eq.s32.totalorder %s17, 1
    %p84 = por %p82, %p83
    %p85 = scmp.ne.s32.totalorder %s74, %s75
    %p86 = scmp.eq.s32.totalorder %s17, 0
    %p87 = por %p85, %p86
    %p88 = scmp.ne.s32.totalorder %s74, %s75
    %p89 = scmp.eq.s32.totalorder %s18, 1
    %p90 = por %p88, %p89
    %p92 = scmp.ne.s32.totalorder %s75, %s91
    %p93 = scmp.eq.s32.totalorder %s18, 0
    %p94 = por %p92, %p93
    %s95 = ssub.s32 %s19, %s38
    %p96 = scmp.eq.s32.totalorder %s95, 0
    %s98 = sadd.s32 %s97, 1
    %s99 = scalar_select %p96, %s97, %s98
    %p102 = pneg %p96
    %p103 = scmp.eq.s32.totalorder %s12, 1
    %p104 = por %p102, %p103
    %p105 = scmp.ne.s32.totalorder %s97, %s100
    %p106 = scmp.eq.s32.totalorder %s12, 0
    %p107 = por %p105, %p106
    %p108 = scmp.ne.s32.totalorder %s97, %s100
    %p109 = scmp.eq.s32.totalorder %s17, 1
    %p110 = por %p108, %p109
    %p111 = scmp.ne.s32.totalorder %s100, %s101
    %p112 = scmp.eq.s32.totalorder %s17, 0
    %p113 = por %p111, %p112
    %p114 = scmp.ne.s32.totalorder %s100, %s101
    %p115 = scmp.eq.s32.totalorder %s18, 1
    %p116 = por %p114, %p115
    %p118 = scmp.ne.s32.totalorder %s101, %s117
    %p119 = scmp.eq.s32.totalorder %s18, 0
    %p120 = por %p118, %p119
    %s121 = ssub.s32 %s19, %s38
    %p122 = scmp.eq.s32.totalorder %s121, 0
    %s124 = sadd.s32 %s123, 1
    %s125 = scalar_select %p122, %s123, %s124
    %p128 = pneg %p122
    %p129 = scmp.eq.s32.totalorder %s12, 1
    %p130 = por %p128, %p129
    %p131 = scmp.ne.s32.totalorder %s123, %s126
    %p132 = scmp.eq.s32.totalorder %s12, 0
    %p133 = por %p131, %p132
    %p134 = scmp.ne.s32.totalorder %s123, %s126
    %p135 = scmp.eq.s32.totalorder %s17, 1
    %p136 = por %p134, %p135
    %p137 = scmp.ne.s32.totalorder %s126, %s127
    %p138 = scmp.eq.s32.totalorder %s17, 0
    %p139 = por %p137, %p138
    %p140 = scmp.ne.s32.totalorder %s126, %s127
    %p141 = scmp.eq.s32.totalorder %s18, 1
    %p142 = por %p140, %p141
    %p144 = scmp.ne.s32.totalorder %s127, %s143
    %p145 = scmp.eq.s32.totalorder %s18, 0
    %p146 = por %p144, %p145
    %s147 = ssub.s32 %s19, %s38
    %p148 = scmp.eq.s32.totalorder %s147, 0
    %s150 = sadd.s32 %s149, 1
    %s151 = scalar_select %p148, %s149, %s150
    %p154 = pneg %p148
    %p155 = scmp.eq.s32.totalorder %s12, 1
    %p156 = por %p154, %p155
    %p157 = scmp.ne.s32.totalorder %s149, %s152
    %p158 = scmp.eq.s32.totalorder %s12, 0
    %p159 = por %p157, %p158
    %p160 = scmp.ne.s32.totalorder %s149, %s152
    %p161 = scmp.eq.s32.totalorder %s17, 1
    %p162 = por %p160, %p161
    %p163 = scmp.ne.s32.totalorder %s152, %s153
    %p164 = scmp.eq.s32.totalorder %s17, 0
    %p165 = por %p163, %p164
    %p166 = scmp.ne.s32.totalorder %s152, %s153
    %p167 = scmp.eq.s32.totalorder %s18, 1
    %p168 = por %p166, %p167
    %p170 = scmp.ne.s32.totalorder %s153, %s169
    %p171 = scmp.eq.s32.totalorder %s18, 0
    %p172 = por %p170, %p171
    %s173 = ssub.s32 %s19, %s38
    %p174 = scmp.eq.s32.totalorder %s173, 0
    %s176 = sadd.s32 %s175, 1
    %s177 = scalar_select %p174, %s175, %s176
    %p180 = pneg %p174
    %p181 = scmp.eq.s32.totalorder %s12, 1
    %p182 = por %p180, %p181
    %p183 = scmp.ne.s32.totalorder %s175, %s178
    %p184 = scmp.eq.s32.totalorder %s12, 0
    %p185 = por %p183, %p184
    %p186 = scmp.ne.s32.totalorder %s175, %s178
    %p187 = scmp.eq.s32.totalorder %s17, 1
    %p188 = por %p186, %p187
    %p189 = scmp.ne.s32.totalorder %s178, %s179
    %p190 = scmp.eq.s32.totalorder %s17, 0
    %p191 = por %p189, %p190
    %p192 = scmp.ne.s32.totalorder %s178, %s179
    %p193 = scmp.eq.s32.totalorder %s18, 1
    %p194 = por %p192, %p193
    %p196 = scmp.ne.s32.totalorder %s179, %s195
    %p197 = scmp.eq.s32.totalorder %s18, 0
    %p198 = por %p196, %p197
    %p199 = scmp.le.s32.totalorder 1, %s12
    %p200 = scmp.lt.s32.totalorder %s12, 3
    %p201 = pnand %p199, %p200
    %p202 = pneg %p201
    // Predicated region
    $region9: #{complex_norm_wrapper_forward.2} parent=5 // pred_check
      _
    $region10: #{complex_norm_wrapper_forward.2} parent=5 // pred_check_branch
      %204 = sbr.rel (%p201) target = $region12
    $region11: #{complex_norm_wrapper_forward.2} parent=5 // pred_region
      %s205 = ssub.s32 %s12, 1
    $region12: #{complex_norm_wrapper_forward.2} parent=5 // pred_fallthru
      _
    %p206 = scmp.lt.s32.totalorder %s12, 2
    // Predicated region
    $region13: #{complex_norm_wrapper_forward.2} parent=5 // pred_check
      %p207 = pneg %p206
    $region14: #{complex_norm_wrapper_forward.2} parent=5 // pred_check_branch
      %209 = sbr.rel (%p207) target = $region16
    $region15: #{complex_norm_wrapper_forward.2} parent=5 // pred_region
      // Predicated region
      $region17: #{complex_norm_wrapper_forward.2} parent=15 // pred_check
        %p210 = pneg %p55
      $region18: #{complex_norm_wrapper_forward.2} parent=15 // pred_check_branch
        %212 = sbr.rel (%p210) target = $region20
      $region19: #{complex_norm_wrapper_forward.2} parent=15 // pred_region
        %s213 = smul.u32 4, %s21
        %p214 = scmp.lt.s32.totalorder %s19, 1
        %s215 = scalar_select %p214, %s19, 1
        %p216 = scmp.lt.s32.totalorder %s20, 0
        %s217 = scalar_select %p216, %s20, 0
        %p218 = scmp.lt.s32.totalorder %s213, 3
        %s219 = scalar_select %p218, %s213, 3
        %s220 = smul.addr %s217, 4
        %s221 = sadd.s32 %s219, %s220
        %s222 = smul.addr %s215, 4
        %s223 = sadd.s32 %s221, %s222
        %s224 = smul.addr %s223, 4
        %s225 = scalar_lea.vmem %s0, %s224
        %s226 = smul.u32 4, %s21
      $region20: #{complex_norm_wrapper_forward.2} parent=15 // pred_fallthru
        _
    $region16: #{complex_norm_wrapper_forward.2} parent=5 // pred_fallthru
      _
    %p227 = scmp.le.s32.totalorder 1, %s12
    %p228 = scmp.lt.s32.totalorder %s12, 3
    %p229 = pnand %p227, %p228
    %p230 = pneg %p229
    // Predicated region
    $region21: #{complex_norm_wrapper_forward.2} parent=5 // pred_check
      _
    $region22: #{complex_norm_wrapper_forward.2} parent=5 // pred_check_branch
      %232 = sbr.rel (%p229) target = $region24
    $region23: #{complex_norm_wrapper_forward.2} parent=5 // pred_region
      %s233 = ssub.s32 %s12, 1
      %s234 = smul.u32 4, %s24
      %p235 = scmp.lt.s32.totalorder %s22, 1
      %s236 = scalar_select %p235, %s22, 1
      %p237 = scmp.lt.s32.totalorder %s23, 0
      %s238 = scalar_select %p237, %s23, 0
      %p239 = scmp.lt.s32.totalorder %s234, 3
      %s240 = scalar_select %p239, %s234, 3
      %s241 = smul.addr %s238, 4
      %s242 = sadd.s32 %s240, %s241
      %s243 = smul.addr %s236, 4
      %s244 = sadd.s32 %s242, %s243
      %s245 = smul.addr %s244, 4
      %s246 = scalar_lea.vmem %s0, %s245
      %p247 = pneg %p61
      %p248 = pneg %p58
      %p249 = pneg %p87
      %p250 = pneg %p84
      %p251 = scmp.lt.s32.totalorder %s22, 1
      %s252 = scalar_select %p251, %s22, 1
      %s253 = scalar_lea.vmem %s1, %s252
      %p254 = pneg %p113
      %p255 = pneg %p110
      %p256 = scmp.lt.s32.totalorder %s22, 1
      %s257 = scalar_select %p256, %s22, 1
      %s258 = scalar_lea.vmem %s2, %s257
      %p259 = pneg %p139
      %p260 = pneg %p136
      %p261 = scmp.lt.s32.totalorder %s22, 1
      %s262 = scalar_select %p261, %s22, 1
      %s263 = scalar_lea.vmem %s3, %s262
      %p264 = pneg %p165
      %p265 = pneg %p162
      %p266 = scmp.lt.s32.totalorder %s22, 1
      %s267 = scalar_select %p266, %s22, 1
      %s268 = scalar_lea.vmem %s4, %s267
      %p269 = pneg %p191
      %p270 = pneg %p188
      %p271 = scmp.lt.s32.totalorder %s22, 1
      %s272 = scalar_select %p271, %s22, 1
      %s273 = scalar_lea.vmem %s5, %s272
      %s274 = smul.u32 4, %s24
      %p275 = scmp.lt.s32.totalorder %s22, 1
      %s276 = scalar_select %p275, %s22, 1
      %p277 = scmp.lt.s32.totalorder %s23, 0
      %s278 = scalar_select %p277, %s23, 0
      %p279 = scmp.lt.s32.totalorder %s274, 3
      %s280 = scalar_select %p279, %s274, 3
      %s281 = smul.addr %s278, 4
      %s282 = sadd.s32 %s280, %s281
      %s283 = smul.addr %s276, 4
      %s284 = sadd.s32 %s282, %s283
      %s285 = smul.addr %s284, 4
      %s286 = scalar_lea.vmem %s0, %s285
      %s287 = smul.u32 4, %s24
      %p288 = scmp.lt.s32.totalorder %s22, 1
      %s289 = scalar_select %p288, %s22, 1
      %s290 = scalar_lea.vmem %s1, %s289
      %p291 = scmp.lt.s32.totalorder %s22, 1
      %s292 = scalar_select %p291, %s22, 1
      %s293 = scalar_lea.vmem %s2, %s292
      %p294 = scmp.lt.s32.totalorder %s22, 1
      %s295 = scalar_select %p294, %s22, 1
      %s296 = scalar_lea.vmem %s3, %s295
      %p297 = scmp.lt.s32.totalorder %s22, 1
      %s298 = scalar_select %p297, %s22, 1
      %s299 = scalar_lea.vmem %s4, %s298
      %p300 = scmp.lt.s32.totalorder %s22, 1
      %s301 = scalar_select %p300, %s22, 1
      %s302 = scalar_lea.vmem %s5, %s301
      %p303 = scmp.eq.s32.totalorder %s23, 0
      %p304 = scmp.eq.s32.totalorder %s24, 0
      %p305 = pnand %p303, %p304
      %p306 = pneg %p305
      %v307 = vld [vmem:[%s286] sm:$0xff]
      %v308 = vld [vmem:[%s286 + $0x8] sm:$0xff]
      %v309 = vlaneseq
      %v310 = vand.u32 %v309, 127
      %v311 = vadd.s32 %v310, 128
      %v312 = vadd.s32 %v310, 256
      %v313 = vadd.s32 %v310, 384
      %v314 = vand.u32 %v310, 1
      %v315 = vand.u32 %v311, 1
      %v316 = vand.u32 %v312, 1
      %v317 = vand.u32 %v313, 1
      %vm318 = vcmp.eq.s32.totalorder %v314, 0
      %vm319 = vcmp.eq.s32.totalorder %v315, 0
      %vm320 = vcmp.eq.s32.totalorder %v316, 0
      %vm321 = vcmp.eq.s32.totalorder %v317, 0
      %v322 = vmul.f32 %v307, %v307
      %v323 = vmul.f32 %v308, %v308
      %v326 = vcombine.high %v307, %v307
      %v327 = vcombine.high %v308, %v308
      %330 = vrot.lane.b32.xlu0 %v307, 127
      %v331 = vpop.permute.xlu0 %330
      %332 = vrot.lane.b32.xlu0 %v326, 127
      %v333 = vpop.permute.xlu0 %332
      %334 = vrot.lane.b32.xlu0 %v308, 127
      %v335 = vpop.permute.xlu0 %334
      %336 = vrot.lane.b32.xlu0 %v327, 127
      %v337 = vpop.permute.xlu0 %336
      %vm338 = vcmp.lt.s32.totalorder %v310, 127
      %v339 = vsel %vm338, %v335, %v337
      %v340 = vsel %vm338, %v333, %v335
      %v341 = vsel %vm338, %v331, %v333
      %v342 = vsel %vm338, %v337, %v331
      %v347 = vcombine.low %v341, %v340
      %v348 = vcombine.low %v339, %v342
      %v351 = vmul.f32 %v307, %v347
      %v352 = vmul.f32 %v308, %v348
      %v353 = vsel %vm318, 1, 0
      %v354 = vsel %vm319, 1, 0
      %v355 = vsel %vm320, 1, 0
      %v356 = vsel %vm321, 1, 0
      %vm357 = vcmp.eq.s32.totalorder %v353, 1
      %vm358 = vcmp.eq.s32.totalorder %v354, 1
      %vm359 = vcmp.eq.s32.totalorder %v355, 1
      %vm360 = vcmp.eq.s32.totalorder %v356, 1
      %v363 = vcombine.high %v351, %v351
      %v364 = vcombine.high %v352, %v352
      %v367 = vsel %vm357, %v351, 0.0
      %v368 = vsel %vm358, %v363, 0.0
      %v369 = vsel %vm359, %v352, 0.0
      %v370 = vsel %vm360, %v364, 0.0
      %v371 = vsel %vm357, %v307, 0.0
      %v372 = vsel %vm358, %v326, 0.0
      %v373 = vsel %vm359, %v308, 0.0
      %v374 = vsel %vm360, %v327, 0.0
      %v377 = vcombine.high %v322, %v322
      %v378 = vcombine.high %v323, %v323
      %v381 = vsel %vm357, %v322, 0.0
      %v382 = vsel %vm358, %v377, 0.0
      %v383 = vsel %vm359, %v323, 0.0
      %v384 = vsel %vm360, %v378, 0.0
      // Predicated region
      $region25: #{complex_norm_wrapper_forward.2} parent=23 // pred_check
        _
      $region26: #{complex_norm_wrapper_forward.2} parent=23 // pred_check_branch
        %386 = sbr.rel (%p305) target = $region28
      $region27: #{complex_norm_wrapper_forward.2} parent=23 // pred_region
        %387 = vst [vmem:[#allocation2] sm:$0xff] 0.0
        %388 = vst [vmem:[#allocation2 + $0x8] sm:$0xff] 0.0
        %389 = vst [vmem:[#allocation2 + $0x10] sm:$0xff] 0.0
        %390 = vst [vmem:[#allocation2 + $0x18] sm:$0xff] 0.0
      $region28: #{complex_norm_wrapper_forward.2} parent=23 // pred_fallthru
        _
      %v391 = vld [vmem:[#allocation2] ss:$8 sm:$0xf]
      %vm392 = vcmask 1043456
      %v393 = vsel %vm392, %v371, 0.0
      %v394 = vrot.slane %v393, 4
      %v395 = vadd.f32 %v393, %v394
      %v396 = vrot.slane %v395, 2
      %v397 = vadd.f32 %v395, %v396
      %v398 = vrot.slane %v397, 1
      %v399 = vadd.f32 %v397, %v398
      %v400 = vsel %vm392, %v372, 0.0
      %v401 = vrot.slane %v400, 4
      %v402 = vadd.f32 %v400, %v401
      %v403 = vrot.slane %v402, 2
      %v404 = vadd.f32 %v402, %v403
      %v405 = vrot.slane %v404, 1
      %v406 = vadd.f32 %v404, %v405
      %v407 = vsel %vm392, %v373, 0.0
      %v408 = vrot.slane %v407, 4
      %v409 = vadd.f32 %v407, %v408
      %v410 = vrot.slane %v409, 2
      %v411 = vadd.f32 %v409, %v410
      %v412 = vrot.slane %v411, 1
      %v413 = vadd.f32 %v411, %v412
      %v414 = vsel %vm392, %v374, 0.0
      %v415 = vrot.slane %v414, 4
      %v416 = vadd.f32 %v414, %v415
      %v417 = vrot.slane %v416, 2
      %v418 = vadd.f32 %v416, %v417
      %v419 = vrot.slane %v418, 1
      %v420 = vadd.f32 %v418, %v419
      %v425 = vcombine.low %v399, %v406
      %v426 = vcombine.low %v413, %v420
      %v428 = vunpack.c.l.s4 1966171168
      %v429 = vunpack.c.0.s8 %v428
      %v430 = vlaneseq
      %v431 = vshrl.u32 %v430, 7
      %v432 = vsub.s32 %v429, %v431
      %v433 = vrot.slane %v425, %v432
      %v435 = vunpack.c.l.s4 1966171168
      %v436 = vunpack.c.0.s8 %v435
      %v437 = vlaneseq
      %v438 = vshrl.u32 %v437, 7
      %v439 = vsub.s32 %v436, %v438
      %v440 = vrot.slane %v426, %v439
      %v441 = vcombine.low %v433, %v440
      %v443 = vunpack.c.l.s4 1966171168
      %v444 = vunpack.c.0.s8 %v443
      %v445 = vlaneseq
      %v446 = vshrl.u32 %v445, 7
      %v447 = vsub.s32 %v444, %v446
      %v448 = vrot.slane %v441, %v447
      %v450 = vadd.f32 %v391, %v448
      %v451 = vlaneseq
      %vm452 = vcmp.ge.s32.totalorder %v451, 0
      %vm453 = vcmp.lt.s32.totalorder %v451, 512
      %vm454 = vmand %vm452, %vm453
      %455 = vst.msk [vmem:[#allocation2] ss:$8 sm:$0xf] %vm454, %v450
      %456 = vst.msk [vmem:[#allocation2] ss:$8 sm:$0x0] %vm454, %v450
      %s457 = scalar_lea.vmem [#allocation2], 1
      %v458 = vld [vmem:[%s457] ss:$8 sm:$0xf]
      %v459 = vsel %vm392, %v307, 0.0
      %v460 = vrot.slane %v459, 4
      %v461 = vadd.f32 %v459, %v460
      %v462 = vrot.slane %v461, 2
      %v463 = vadd.f32 %v461, %v462
      %v464 = vrot.slane %v463, 1
      %v465 = vadd.f32 %v463, %v464
      %v466 = vsel %vm392, %v326, 0.0
      %v467 = vrot.slane %v466, 4
      %v468 = vadd.f32 %v466, %v467
      %v469 = vrot.slane %v468, 2
      %v470 = vadd.f32 %v468, %v469
      %v471 = vrot.slane %v470, 1
      %v472 = vadd.f32 %v470, %v471
      %v473 = vsel %vm392, %v308, 0.0
      %v474 = vrot.slane %v473, 4
      %v475 = vadd.f32 %v473, %v474
      %v476 = vrot.slane %v475, 2
      %v477 = vadd.f32 %v475, %v476
      %v478 = vrot.slane %v477, 1
      %v479 = vadd.f32 %v477, %v478
      %v480 = vsel %vm392, %v327, 0.0
      %v481 = vrot.slane %v480, 4
      %v482 = vadd.f32 %v480, %v481
      %v483 = vrot.slane %v482, 2
      %v484 = vadd.f32 %v482, %v483
      %v485 = vrot.slane %v484, 1
      %v486 = vadd.f32 %v484, %v485
      %v491 = vcombine.low %v465, %v472
      %v492 = vcombine.low %v479, %v486
      %v494 = vunpack.c.l.s4 1966171168
      %v495 = vunpack.c.0.s8 %v494
      %v496 = vlaneseq
      %v497 = vshrl.u32 %v496, 7
      %v498 = vsub.s32 %v495, %v497
      %v499 = vrot.slane %v491, %v498
      %v501 = vunpack.c.l.s4 1966171168
      %v502 = vunpack.c.0.s8 %v501
      %v503 = vlaneseq
      %v504 = vshrl.u32 %v503, 7
      %v505 = vsub.s32 %v502, %v504
      %v506 = vrot.slane %v492, %v505
      %v507 = vcombine.low %v499, %v506
      %v509 = vunpack.c.l.s4 1966171168
      %v510 = vunpack.c.0.s8 %v509
      %v511 = vlaneseq
      %v512 = vshrl.u32 %v511, 7
      %v513 = vsub.s32 %v510, %v512
      %v514 = vrot.slane %v507, %v513
      %v516 = vadd.f32 %v458, %v514
      %517 = vst.msk [vmem:[%s457] ss:$8 sm:$0xf] %vm454, %v516
      %518 = vst.msk [vmem:[%s457] ss:$8 sm:$0x0] %vm454, %v516
      %s519 = scalar_lea.vmem [#allocation2], 2
      %v520 = vld [vmem:[%s519] ss:$8 sm:$0xf]
      %v521 = vsel %vm392, %v381, 0.0
      %v522 = vrot.slane %v521, 4
      %v523 = vadd.f32 %v521, %v522
      %v524 = vrot.slane %v523, 2
      %v525 = vadd.f32 %v523, %v524
      %v526 = vrot.slane %v525, 1
      %v527 = vadd.f32 %v525, %v526
      %v528 = vsel %vm392, %v382, 0.0
      %v529 = vrot.slane %v528, 4
      %v530 = vadd.f32 %v528, %v529
      %v531 = vrot.slane %v530, 2
      %v532 = vadd.f32 %v530, %v531
      %v533 = vrot.slane %v532, 1
      %v534 = vadd.f32 %v532, %v533
      %v535 = vsel %vm392, %v383, 0.0
      %v536 = vrot.slane %v535, 4
      %v537 = vadd.f32 %v535, %v536
      %v538 = vrot.slane %v537, 2
      %v539 = vadd.f32 %v537, %v538
      %v540 = vrot.slane %v539, 1
      %v541 = vadd.f32 %v539, %v540
      %v542 = vsel %vm392, %v384, 0.0
      %v543 = vrot.slane %v542, 4
      %v544 = vadd.f32 %v542, %v543
      %v545 = vrot.slane %v544, 2
      %v546 = vadd.f32 %v544, %v545
      %v547 = vrot.slane %v546, 1
      %v548 = vadd.f32 %v546, %v547
      %v553 = vcombine.low %v527, %v534
      %v554 = vcombine.low %v541, %v548
      %v556 = vunpack.c.l.s4 1966171168
      %v557 = vunpack.c.0.s8 %v556
      %v558 = vlaneseq
      %v559 = vshrl.u32 %v558, 7
      %v560 = vsub.s32 %v557, %v559
      %v561 = vrot.slane %v553, %v560
      %v563 = vunpack.c.l.s4 1966171168
      %v564 = vunpack.c.0.s8 %v563
      %v565 = vlaneseq
      %v566 = vshrl.u32 %v565, 7
      %v567 = vsub.s32 %v564, %v566
      %v568 = vrot.slane %v554, %v567
      %v569 = vcombine.low %v561, %v568
      %v571 = vunpack.c.l.s4 1966171168
      %v572 = vunpack.c.0.s8 %v571
      %v573 = vlaneseq
      %v574 = vshrl.u32 %v573, 7
      %v575 = vsub.s32 %v572, %v574
      %v576 = vrot.slane %v569, %v575
      %v578 = vadd.f32 %v520, %v576
      %579 = vst.msk [vmem:[%s519] ss:$8 sm:$0xf] %vm454, %v578
      %580 = vst.msk [vmem:[%s519] ss:$8 sm:$0x0] %vm454, %v578
      %s581 = scalar_lea.vmem [#allocation2], 3
      %v582 = vld [vmem:[%s581] ss:$8 sm:$0xf]
      %v583 = vsel %vm392, %v322, 0.0
      %v584 = vrot.slane %v583, 4
      %v585 = vadd.f32 %v583, %v584
      %v586 = vrot.slane %v585, 2
      %v587 = vadd.f32 %v585, %v586
      %v588 = vrot.slane %v587, 1
      %v589 = vadd.f32 %v587, %v588
      %v590 = vsel %vm392, %v377, 0.0
      %v591 = vrot.slane %v590, 4
      %v592 = vadd.f32 %v590, %v591
      %v593 = vrot.slane %v592, 2
      %v594 = vadd.f32 %v592, %v593
      %v595 = vrot.slane %v594, 1
      %v596 = vadd.f32 %v594, %v595
      %v597 = vsel %vm392, %v323, 0.0
      %v598 = vrot.slane %v597, 4
      %v599 = vadd.f32 %v597, %v598
      %v600 = vrot.slane %v599, 2
      %v601 = vadd.f32 %v599, %v600
      %v602 = vrot.slane %v601, 1
      %v603 = vadd.f32 %v601, %v602
      %v604 = vsel %vm392, %v378, 0.0
      %v605 = vrot.slane %v604, 4
      %v606 = vadd.f32 %v604, %v605
      %v607 = vrot.slane %v606, 2
      %v608 = vadd.f32 %v606, %v607
      %v609 = vrot.slane %v608, 1
      %v610 = vadd.f32 %v608, %v609
      %v615 = vcombine.low %v589, %v596
      %v616 = vcombine.low %v603, %v610
      %v618 = vunpack.c.l.s4 1966171168
      %v619 = vunpack.c.0.s8 %v618
      %v620 = vlaneseq
      %v621 = vshrl.u32 %v620, 7
      %v622 = vsub.s32 %v619, %v621
      %v623 = vrot.slane %v615, %v622
      %v625 = vunpack.c.l.s4 1966171168
      %v626 = vunpack.c.0.s8 %v625
      %v627 = vlaneseq
      %v628 = vshrl.u32 %v627, 7
      %v629 = vsub.s32 %v626, %v628
      %v630 = vrot.slane %v616, %v629
      %v631 = vcombine.low %v623, %v630
      %v633 = vunpack.c.l.s4 1966171168
      %v634 = vunpack.c.0.s8 %v633
      %v635 = vlaneseq
      %v636 = vshrl.u32 %v635, 7
      %v637 = vsub.s32 %v634, %v636
      %v638 = vrot.slane %v631, %v637
      %v640 = vadd.f32 %v582, %v638
      %641 = vst.msk [vmem:[%s581] ss:$8 sm:$0xf] %vm454, %v640
      %642 = vst.msk [vmem:[%s581] ss:$8 sm:$0x0] %vm454, %v640
      %s643 = scalar_lea.vmem [#allocation2], 4
      %v644 = vld [vmem:[%s643] ss:$8 sm:$0xf]
      %v645 = vsel %vm392, %v367, 0.0
      %v646 = vrot.slane %v645, 4
      %v647 = vadd.f32 %v645, %v646
      %v648 = vrot.slane %v647, 2
      %v649 = vadd.f32 %v647, %v648
      %v650 = vrot.slane %v649, 1
      %v651 = vadd.f32 %v649, %v650
      %v652 = vsel %vm392, %v368, 0.0
      %v653 = vrot.slane %v652, 4
      %v654 = vadd.f32 %v652, %v653
      %v655 = vrot.slane %v654, 2
      %v656 = vadd.f32 %v654, %v655
      %v657 = vrot.slane %v656, 1
      %v658 = vadd.f32 %v656, %v657
      %v659 = vsel %vm392, %v369, 0.0
      %v660 = vrot.slane %v659, 4
      %v661 = vadd.f32 %v659, %v660
      %v662 = vrot.slane %v661, 2
      %v663 = vadd.f32 %v661, %v662
      %v664 = vrot.slane %v663, 1
      %v665 = vadd.f32 %v663, %v664
      %v666 = vsel %vm392, %v370, 0.0
      %v667 = vrot.slane %v666, 4
      %v668 = vadd.f32 %v666, %v667
      %v669 = vrot.slane %v668, 2
      %v670 = vadd.f32 %v668, %v669
      %v671 = vrot.slane %v670, 1
      %v672 = vadd.f32 %v670, %v671
      %v677 = vcombine.low %v651, %v658
      %v678 = vcombine.low %v665, %v672
      %v680 = vunpack.c.l.s4 1966171168
      %v681 = vunpack.c.0.s8 %v680
      %v682 = vlaneseq
      %v683 = vshrl.u32 %v682, 7
      %v684 = vsub.s32 %v681, %v683
      %v685 = vrot.slane %v677, %v684
      %v687 = vunpack.c.l.s4 1966171168
      %v688 = vunpack.c.0.s8 %v687
      %v689 = vlaneseq
      %v690 = vshrl.u32 %v689, 7
      %v691 = vsub.s32 %v688, %v690
      %v692 = vrot.slane %v678, %v691
      %v693 = vcombine.low %v685, %v692
      %v695 = vunpack.c.l.s4 1966171168
      %v696 = vunpack.c.0.s8 %v695
      %v697 = vlaneseq
      %v698 = vshrl.u32 %v697, 7
      %v699 = vsub.s32 %v696, %v698
      %v700 = vrot.slane %v693, %v699
      %v702 = vadd.f32 %v644, %v700
      %703 = vst.msk [vmem:[%s643] ss:$8 sm:$0xf] %vm454, %v702
      %704 = vst.msk [vmem:[%s643] ss:$8 sm:$0x0] %vm454, %v702
      // Predicated region
      $region29: #{complex_norm_wrapper_forward.2} parent=23 // pred_check
        _
      $region30: #{complex_norm_wrapper_forward.2} parent=23 // pred_check_branch
        %706 = sbr.rel (%p305) target = $region32
      $region31: #{complex_norm_wrapper_forward.2} parent=23 // pred_region
        %v707 = vld [vmem:[#allocation2] ss:$8 sm:$0xf]
        %v709 = vlaneseq
        %v710 = vshrl.u32 %v709, 7
        %v711 = vsub.s32 0, %v710
        %v712 = vrot.slane %v707, %v711
        %v713 = vlaneseq
        %v714 = vshrl.u32 %v713, 7
        %v715 = vsub.s32 1, %v714
        %v716 = vrot.slane %v707, %v715
        %v717 = vlaneseq
        %v718 = vshrl.u32 %v717, 7
        %v719 = vsub.s32 2, %v718
        %v720 = vrot.slane %v707, %v719
        %v721 = vlaneseq
        %v722 = vshrl.u32 %v721, 7
        %v723 = vsub.s32 3, %v722
        %v724 = vrot.slane %v707, %v723
        %vm729 = vcmask 1040384
        %v730 = vsel %vm729, %v712, 0.0
        %v731 = vsel %vm729, %v716, 0.0
        %v732 = vadd.f32 %v730, %v731
        %v733 = vsel %vm729, %v720, 0.0
        %v734 = vadd.f32 %v732, %v733
        %v735 = vsel %vm729, %v724, 0.0
        %v736 = vadd.f32 %v734, %v735
        %737 = vadd.xlane.f32.xlu0 %v736
        %v738 = vpop.xlane.xlu0 %737
        %v739 = vrot.slane %v738, 4
        %v740 = vadd.f32 %v738, %v739
        %v741 = vrot.slane %v740, 2
        %v742 = vadd.f32 %v740, %v741
        %v743 = vrot.slane %v742, 1
        %v744 = vadd.f32 %v742, %v743
        %s745 = vtos %v744
        %v746 = vld [vmem:[%s457] ss:$8 sm:$0xf]
        %v748 = vlaneseq
        %v749 = vshrl.u32 %v748, 7
        %v750 = vsub.s32 0, %v749
        %v751 = vrot.slane %v746, %v750
        %v752 = vlaneseq
        %v753 = vshrl.u32 %v752, 7
        %v754 = vsub.s32 1, %v753
        %v755 = vrot.slane %v746, %v754
        %v756 = vlaneseq
        %v757 = vshrl.u32 %v756, 7
        %v758 = vsub.s32 2, %v757
        %v759 = vrot.slane %v746, %v758
        %v760 = vlaneseq
        %v761 = vshrl.u32 %v760, 7
        %v762 = vsub.s32 3, %v761
        %v763 = vrot.slane %v746, %v762
        %v768 = vsel %vm729, %v751, 0.0
        %v769 = vsel %vm729, %v755, 0.0
        %v770 = vadd.f32 %v768, %v769
        %v771 = vsel %vm729, %v759, 0.0
        %v772 = vadd.f32 %v770, %v771
        %v773 = vsel %vm729, %v763, 0.0
        %v774 = vadd.f32 %v772, %v773
        %775 = vadd.xlane.f32.xlu0 %v774
        %v776 = vpop.xlane.xlu0 %775
        %v777 = vrot.slane %v776, 4
        %v778 = vadd.f32 %v776, %v777
        %v779 = vrot.slane %v778, 2
        %v780 = vadd.f32 %v778, %v779
        %v781 = vrot.slane %v780, 1
        %v782 = vadd.f32 %v780, %v781
        %s783 = vtos %v782
        %v784 = vld [vmem:[%s519] ss:$8 sm:$0xf]
        %v786 = vlaneseq
        %v787 = vshrl.u32 %v786, 7
        %v788 = vsub.s32 0, %v787
        %v789 = vrot.slane %v784, %v788
        %v790 = vlaneseq
        %v791 = vshrl.u32 %v790, 7
        %v792 = vsub.s32 1, %v791
        %v793 = vrot.slane %v784, %v792
        %v794 = vlaneseq
        %v795 = vshrl.u32 %v794, 7
        %v796 = vsub.s32 2, %v795
        %v797 = vrot.slane %v784, %v796
        %v798 = vlaneseq
        %v799 = vshrl.u32 %v798, 7
        %v800 = vsub.s32 3, %v799
        %v801 = vrot.slane %v784, %v800
        %v806 = vsel %vm729, %v789, 0.0
        %v807 = vsel %vm729, %v793, 0.0
        %v808 = vadd.f32 %v806, %v807
        %v809 = vsel %vm729, %v797, 0.0
        %v810 = vadd.f32 %v808, %v809
        %v811 = vsel %vm729, %v801, 0.0
        %v812 = vadd.f32 %v810, %v811
        %813 = vadd.xlane.f32.xlu0 %v812
        %v814 = vpop.xlane.xlu0 %813
        %v815 = vrot.slane %v814, 4
        %v816 = vadd.f32 %v814, %v815
        %v817 = vrot.slane %v816, 2
        %v818 = vadd.f32 %v816, %v817
        %v819 = vrot.slane %v818, 1
        %v820 = vadd.f32 %v818, %v819
        %s821 = vtos %v820
        %v822 = vld [vmem:[%s581] ss:$8 sm:$0xf]
        %v824 = vlaneseq
        %v825 = vshrl.u32 %v824, 7
        %v826 = vsub.s32 0, %v825
        %v827 = vrot.slane %v822, %v826
        %v828 = vlaneseq
        %v829 = vshrl.u32 %v828, 7
        %v830 = vsub.s32 1, %v829
        %v831 = vrot.slane %v822, %v830
        %v832 = vlaneseq
        %v833 = vshrl.u32 %v832, 7
        %v834 = vsub.s32 2, %v833
        %v835 = vrot.slane %v822, %v834
        %v836 = vlaneseq
        %v837 = vshrl.u32 %v836, 7
        %v838 = vsub.s32 3, %v837
        %v839 = vrot.slane %v822, %v838
        %v844 = vsel %vm729, %v827, 0.0
        %v845 = vsel %vm729, %v831, 0.0
        %v846 = vadd.f32 %v844, %v845
        %v847 = vsel %vm729, %v835, 0.0
        %v848 = vadd.f32 %v846, %v847
        %v849 = vsel %vm729, %v839, 0.0
        %v850 = vadd.f32 %v848, %v849
        %851 = vadd.xlane.f32.xlu0 %v850
        %v852 = vpop.xlane.xlu0 %851
        %v853 = vrot.slane %v852, 4
        %v854 = vadd.f32 %v852, %v853
        %v855 = vrot.slane %v854, 2
        %v856 = vadd.f32 %v854, %v855
        %v857 = vrot.slane %v856, 1
        %v858 = vadd.f32 %v856, %v857
        %s859 = vtos %v858
        %v860 = vld [vmem:[%s643] ss:$8 sm:$0xf]
        %v862 = vlaneseq
        %v863 = vshrl.u32 %v862, 7
        %v864 = vsub.s32 0, %v863
        %v865 = vrot.slane %v860, %v864
        %v866 = vlaneseq
        %v867 = vshrl.u32 %v866, 7
        %v868 = vsub.s32 1, %v867
        %v869 = vrot.slane %v860, %v868
        %v870 = vlaneseq
        %v871 = vshrl.u32 %v870, 7
        %v872 = vsub.s32 2, %v871
        %v873 = vrot.slane %v860, %v872
        %v874 = vlaneseq
        %v875 = vshrl.u32 %v874, 7
        %v876 = vsub.s32 3, %v875
        %v877 = vrot.slane %v860, %v876
        %v882 = vsel %vm729, %v865, 0.0
        %v883 = vsel %vm729, %v869, 0.0
        %v884 = vadd.f32 %v882, %v883
        %v885 = vsel %vm729, %v873, 0.0
        %v886 = vadd.f32 %v884, %v885
        %v887 = vsel %vm729, %v877, 0.0
        %v888 = vadd.f32 %v886, %v887
        %889 = vadd.xlane.f32.xlu0 %v888
        %v890 = vpop.xlane.xlu0 %889
        %v891 = vrot.slane %v890, 4
        %v892 = vadd.f32 %v890, %v891
        %v893 = vrot.slane %v892, 2
        %v894 = vadd.f32 %v892, %v893
        %v895 = vrot.slane %v894, 1
        %v896 = vadd.f32 %v894, %v895
        %s897 = vtos %v896
        %v898 = vstv %s745
        %v899 = vadd.f32 %v898, 0.0
        %vm900 = vcmask 0
        %901 = vst.msk [vmem:[%s290] sm:$0x1] %vm900, %v899
        %s902 = ssub.f32 %s783, %s745
        %v903 = vstv %s902
        %v904 = vadd.f32 %v903, 0.0
        %905 = vst.msk [vmem:[%s293] sm:$0x1] %vm900, %v904
        %v906 = vstv %s821
        %v907 = vadd.f32 %v906, 0.0
        %908 = vst.msk [vmem:[%s296] sm:$0x1] %vm900, %v907
        %s909 = ssub.f32 %s859, %s821
        %v910 = vstv %s909
        %v911 = vadd.f32 %v910, 0.0
        %912 = vst.msk [vmem:[%s299] sm:$0x1] %vm900, %v911
        %v913 = vstv %s897
        %v914 = vadd.f32 %v913, 0.0
        %915 = vst.msk [vmem:[%s302] sm:$0x1] %vm900, %v914
      $region32: #{complex_norm_wrapper_forward.2} parent=23 // pred_fallthru
        _
      %p916 = scmp.lt.s32.totalorder %s22, 1
      %s917 = scalar_select %p916, %s22, 1
      %s918 = scalar_lea.vmem %s1, %s917
      %p919 = scmp.lt.s32.totalorder %s22, 1
      %s920 = scalar_select %p919, %s22, 1
      %s921 = scalar_lea.vmem %s2, %s920
      %p922 = scmp.lt.s32.totalorder %s22, 1
      %s923 = scalar_select %p922, %s22, 1
      %s924 = scalar_lea.vmem %s3, %s923
      %p925 = scmp.lt.s32.totalorder %s22, 1
      %s926 = scalar_select %p925, %s22, 1
      %s927 = scalar_lea.vmem %s4, %s926
      %p928 = scmp.lt.s32.totalorder %s22, 1
      %s929 = scalar_select %p928, %s22, 1
      %s930 = scalar_lea.vmem %s5, %s929
      // Predicated region
      $region33: #{complex_norm_wrapper_forward.2} parent=23 // pred_check
        %p931 = pneg %p84
      $region34: #{complex_norm_wrapper_forward.2} parent=23 // pred_check_branch
        %933 = sbr.rel (%p931) target = $region36
      $region35: #{complex_norm_wrapper_forward.2} parent=23 // pred_region
        _
      $region36: #{complex_norm_wrapper_forward.2} parent=23 // pred_fallthru
        _
      // Predicated region
      $region37: #{complex_norm_wrapper_forward.2} parent=23 // pred_check
        %p934 = pneg %p110
      $region38: #{complex_norm_wrapper_forward.2} parent=23 // pred_check_branch
        %936 = sbr.rel (%p934) target = $region40
      $region39: #{complex_norm_wrapper_forward.2} parent=23 // pred_region
        _
      $region40: #{complex_norm_wrapper_forward.2} parent=23 // pred_fallthru
        _
      // Predicated region
      $region41: #{complex_norm_wrapper_forward.2} parent=23 // pred_check
        %p937 = pneg %p136
      $region42: #{complex_norm_wrapper_forward.2} parent=23 // pred_check_branch
        %939 = sbr.rel (%p937) target = $region44
      $region43: #{complex_norm_wrapper_forward.2} parent=23 // pred_region
        _
      $region44: #{complex_norm_wrapper_forward.2} parent=23 // pred_fallthru
        _
      // Predicated region
      $region45: #{complex_norm_wrapper_forward.2} parent=23 // pred_check
        %p940 = pneg %p162
      $region46: #{complex_norm_wrapper_forward.2} parent=23 // pred_check_branch
        %942 = sbr.rel (%p940) target = $region48
      $region47: #{complex_norm_wrapper_forward.2} parent=23 // pred_region
        _
      $region48: #{complex_norm_wrapper_forward.2} parent=23 // pred_fallthru
        _
      // Predicated region
      $region49: #{complex_norm_wrapper_forward.2} parent=23 // pred_check
        %p943 = pneg %p188
      $region50: #{complex_norm_wrapper_forward.2} parent=23 // pred_check_branch
        %945 = sbr.rel (%p943) target = $region52
      $region51: #{complex_norm_wrapper_forward.2} parent=23 // pred_region
        _
      $region52: #{complex_norm_wrapper_forward.2} parent=23 // pred_fallthru
        _
    $region24: #{complex_norm_wrapper_forward.2} parent=5 // pred_fallthru
      _
    %p946 = scmp.le.s32.totalorder 2, %s12
    // Predicated region
    $region53: #{complex_norm_wrapper_forward.2} parent=5 // pred_check
      %p947 = pneg %p946
    $region54: #{complex_norm_wrapper_forward.2} parent=5 // pred_check_branch
      %949 = sbr.rel (%p947) target = $region56
    $region55: #{complex_norm_wrapper_forward.2} parent=5 // pred_region
      %s950 = ssub.s32 %s12, 2
      // Predicated region
      $region57: #{complex_norm_wrapper_forward.2} parent=55 // pred_check
        %p951 = pneg %p90
      $region58: #{complex_norm_wrapper_forward.2} parent=55 // pred_check_branch
        %953 = sbr.rel (%p951) target = $region60
      $region59: #{complex_norm_wrapper_forward.2} parent=55 // pred_region
        %p954 = scmp.lt.s32.totalorder %s25, 1
        %s955 = scalar_select %p954, %s25, 1
        %s956 = scalar_lea.vmem %s1, %s955
      $region60: #{complex_norm_wrapper_forward.2} parent=55 // pred_fallthru
        _
      // Predicated region
      $region61: #{complex_norm_wrapper_forward.2} parent=55 // pred_check
        %p957 = pneg %p116
      $region62: #{complex_norm_wrapper_forward.2} parent=55 // pred_check_branch
        %959 = sbr.rel (%p957) target = $region64
      $region63: #{complex_norm_wrapper_forward.2} parent=55 // pred_region
        %p960 = scmp.lt.s32.totalorder %s25, 1
        %s961 = scalar_select %p960, %s25, 1
        %s962 = scalar_lea.vmem %s2, %s961
      $region64: #{complex_norm_wrapper_forward.2} parent=55 // pred_fallthru
        _
      // Predicated region
      $region65: #{complex_norm_wrapper_forward.2} parent=55 // pred_check
        %p963 = pneg %p142
      $region66: #{complex_norm_wrapper_forward.2} parent=55 // pred_check_branch
        %965 = sbr.rel (%p963) target = $region68
      $region67: #{complex_norm_wrapper_forward.2} parent=55 // pred_region
        %p966 = scmp.lt.s32.totalorder %s25, 1
        %s967 = scalar_select %p966, %s25, 1
        %s968 = scalar_lea.vmem %s3, %s967
      $region68: #{complex_norm_wrapper_forward.2} parent=55 // pred_fallthru
        _
      // Predicated region
      $region69: #{complex_norm_wrapper_forward.2} parent=55 // pred_check
        %p969 = pneg %p168
      $region70: #{complex_norm_wrapper_forward.2} parent=55 // pred_check_branch
        %971 = sbr.rel (%p969) target = $region72
      $region71: #{complex_norm_wrapper_forward.2} parent=55 // pred_region
        %p972 = scmp.lt.s32.totalorder %s25, 1
        %s973 = scalar_select %p972, %s25, 1
        %s974 = scalar_lea.vmem %s4, %s973
      $region72: #{complex_norm_wrapper_forward.2} parent=55 // pred_fallthru
        _
      // Predicated region
      $region73: #{complex_norm_wrapper_forward.2} parent=55 // pred_check
        %p975 = pneg %p194
      $region74: #{complex_norm_wrapper_forward.2} parent=55 // pred_check_branch
        %977 = sbr.rel (%p975) target = $region76
      $region75: #{complex_norm_wrapper_forward.2} parent=55 // pred_region
        %p978 = scmp.lt.s32.totalorder %s25, 1
        %s979 = scalar_select %p978, %s25, 1
        %s980 = scalar_lea.vmem %s5, %s979
      $region76: #{complex_norm_wrapper_forward.2} parent=55 // pred_fallthru
        _
    $region56: #{complex_norm_wrapper_forward.2} parent=5 // pred_fallthru
      _
  $region6: #{complex_norm_wrapper_forward.2} parent=0 // loop_footer
    %s16 = sadd.s32 1, %s12
  $region7: #{complex_norm_wrapper_forward.2} parent=0 // loop_footer_branch
    %11 = sbr.rel target = $region3
  $region8: #{complex_norm_wrapper_forward.2} parent=0 // loop_exit
    _

// kernel: complex_norm_wrapper_forward.3
$region0: #{complex_norm_wrapper_forward.3}
  #allocation0 [shape = 'u32[]', space=smem, size = 0x4, offset = 0x4, fixed_abs, tag = 'smem constant byte address 0x4 - core index']
  #allocation1 [shape = 'u32[144,128]{1,0:T(1,128)}', space=vmem, size = 0x12000, scoped, tag = 'internal scratch']
  %s0 = inlined_call_operand.vmem [shape: f32[88], index: 0, kind: input, shape index: {}]
  %s1 = inlined_call_operand.vmem [shape: f32[2,4,512], index: 1, kind: input, shape index: {}]
  %s2 = inlined_call_operand.vmem [shape: f32[2,4,512], index: 2, kind: output, shape index: {}]
  %s3 = sld [smem:[#allocation0]]
  $region45: #{complex_norm_wrapper_forward.3} parent=0
    _
  %s5 = ssub.s32 1, %s3
  %s6 = scalar_select 0, %s5, %s3
  $region1: #{complex_norm_wrapper_forward.3} parent=0
    #allocation2 [shape = 'u8[512]{0}', space=smem, size = 0x200, scoped, tag = 'input window, operand 0, single buffered']
    #allocation3 [shape = 's32[2]{0}', space=sflag, size = 0x8, scoped, tag = 'scoped memory for complex_norm_wrapper_forward.3']
    %7 = vsyncpa [#allocation3], 0
    loop: start=0, step=1, limit=4
    $region2: #{complex_norm_wrapper_forward.3} parent=1 // loop_pre_header
      _
    $region3: #{complex_norm_wrapper_forward.3} parent=1 // loop_header
      %s9 = sphi 0, %s13
      %p10 = scmp.ge.s32.totalorder %s9, 4
      %s16 = sphi 0, %s28
      %s17 = sphi 0, %s24
      %s18 = sphi 0, %s16
      %s19 = sphi 0, %s17
      %s20 = sphi 0, %s18
      %s21 = sphi 0, %s19
      %s29 = sphi 0, %s29
      %s31 = sphi 0, %s29
      %s32 = sphi 0, %s31
      %s46 = sphi 0, %s32
      %s54 = sphi 0, %s56
      %s57 = sphi 0, %s54
      %s58 = sphi 0, %s57
      %s74 = sphi 0, %s58
      %s82 = sphi 0, %s84
      %s85 = sphi 0, %s82
      %s86 = sphi 0, %s85
      %s102 = sphi 0, %s86
    $region4: #{complex_norm_wrapper_forward.3} parent=1 // loop_header_branch
      %12 = sbr.rel (%p10) target = $region8
    $region5: #{complex_norm_wrapper_forward.3} parent=1 // loop_body
      %s14 = ssub.s32 %s9, 1
      %s15 = ssub.s32 %s9, 2
      %s22 = sadd.s32 1, %s17
      %p23 = scmp.ge.s32.totalorder %s22, 1
      %s24 = scalar_select %p23, 0, %s22
      %s25 = sadd.s32 1, %s16
      %s26 = scalar_select %p23, %s25, %s16
      %p27 = scmp.ge.s32.totalorder %s26, 2
      %s28 = scalar_select %p27, 0, %s26
      %s30 = sadd.s32 %s29, 1
      %p33 = scmp.eq.s32.totalorder %s9, 1
      %p34 = scmp.ne.s32.totalorder %s29, %s31
      %p35 = scmp.eq.s32.totalorder %s9, 0
      %p36 = por %p34, %p35
      %p37 = scmp.ne.s32.totalorder %s29, %s31
      %p38 = scmp.eq.s32.totalorder %s14, 1
      %p39 = por %p37, %p38
      %p40 = scmp.ne.s32.totalorder %s31, %s32
      %p41 = scmp.eq.s32.totalorder %s14, 0
      %p42 = por %p40, %p41
      %p43 = scmp.ne.s32.totalorder %s31, %s32
      %p44 = scmp.eq.s32.totalorder %s15, 1
      %p45 = por %p43, %p44
      %p47 = scmp.ne.s32.totalorder %s32, %s46
      %p48 = scmp.eq.s32.totalorder %s15, 0
      %p49 = por %p47, %p48
      %s50 = ssub.s32 %s16, %s28
      %s51 = ssub.s32 %s17, %s24
      %s52 = sor.u32 %s50, %s51
      %p53 = scmp.eq.s32.totalorder %s52, 0
      %s55 = sadd.s32 %s54, 1
      %s56 = scalar_select %p53, %s54, %s55
      %p59 = pneg %p53
      %p60 = scmp.eq.s32.totalorder %s9, 1
      %p61 = por %p59, %p60
      %p62 = scmp.ne.s32.totalorder %s54, %s57
      %p63 = scmp.eq.s32.totalorder %s9, 0
      %p64 = por %p62, %p63
      %p65 = scmp.ne.s32.totalorder %s54, %s57
      %p66 = scmp.eq.s32.totalorder %s14, 1
      %p67 = por %p65, %p66
      %p68 = scmp.ne.s32.totalorder %s57, %s58
      %p69 = scmp.eq.s32.totalorder %s14, 0
      %p70 = por %p68, %p69
      %p71 = scmp.ne.s32.totalorder %s57, %s58
      %p72 = scmp.eq.s32.totalorder %s15, 1
      %p73 = por %p71, %p72
      %p75 = scmp.ne.s32.totalorder %s58, %s74
      %p76 = scmp.eq.s32.totalorder %s15, 0
      %p77 = por %p75, %p76
      %s78 = ssub.s32 %s16, %s28
      %s79 = ssub.s32 %s17, %s24
      %s80 = sor.u32 %s78, %s79
      %p81 = scmp.eq.s32.totalorder %s80, 0
      %s83 = sadd.s32 %s82, 1
      %s84 = scalar_select %p81, %s82, %s83
      %p87 = pneg %p81
      %p88 = scmp.eq.s32.totalorder %s9, 1
      %p89 = por %p87, %p88
      %p90 = scmp.ne.s32.totalorder %s82, %s85
      %p91 = scmp.eq.s32.totalorder %s9, 0
      %p92 = por %p90, %p91
      %p93 = scmp.ne.s32.totalorder %s82, %s85
      %p94 = scmp.eq.s32.totalorder %s14, 1
      %p95 = por %p93, %p94
      %p96 = scmp.ne.s32.totalorder %s85, %s86
      %p97 = scmp.eq.s32.totalorder %s14, 0
      %p98 = por %p96, %p97
      %p99 = scmp.ne.s32.totalorder %s85, %s86
      %p100 = scmp.eq.s32.totalorder %s15, 1
      %p101 = por %p99, %p100
      %p103 = scmp.ne.s32.totalorder %s86, %s102
      %p104 = scmp.eq.s32.totalorder %s15, 0
      %p105 = por %p103, %p104
      %p106 = scmp.le.s32.totalorder 1, %s9
      %p107 = scmp.lt.s32.totalorder %s9, 3
      %p108 = pnand %p106, %p107
      %p109 = pneg %p108
      // Predicated region
      $region9: #{complex_norm_wrapper_forward.3} parent=5 // pred_check
        _
      $region10: #{complex_norm_wrapper_forward.3} parent=5 // pred_check_branch
        %111 = sbr.rel (%p108) target = $region12
      $region11: #{complex_norm_wrapper_forward.3} parent=5 // pred_region
        %s112 = ssub.s32 %s9, 1
        // Predicated region
        $region13: #{complex_norm_wrapper_forward.3} parent=11 // pred_check
          %p113 = pneg %p42
        $region14: #{complex_norm_wrapper_forward.3} parent=11 // pred_check_branch
          %115 = sbr.rel (%p113) target = $region16
        $region15: #{complex_norm_wrapper_forward.3} parent=11 // pred_region
          %s117 = ssub.s32 16, 16
          %118 = vsyncadd [#allocation3], %s117
          %s120 = sshll.u32 %s0, 4
          %s121 = int_to_ptr.vmem [resolvable:$true] %s120
          %123 = dma.vmem_to_smem %s121, 16, [#allocation2], [#allocation3]
        $region16: #{complex_norm_wrapper_forward.3} parent=11 // pred_fallthru
          _
      $region12: #{complex_norm_wrapper_forward.3} parent=5 // pred_fallthru
        _
      %p124 = scmp.lt.s32.totalorder %s9, 2
      // Predicated region
      $region17: #{complex_norm_wrapper_forward.3} parent=5 // pred_check
        %p125 = pneg %p124
      $region18: #{complex_norm_wrapper_forward.3} parent=5 // pred_check_branch
        %127 = sbr.rel (%p125) target = $region20
      $region19: #{complex_norm_wrapper_forward.3} parent=5 // pred_region
        // Predicated region
        $region21: #{complex_norm_wrapper_forward.3} parent=19 // pred_check
          %p128 = pneg %p64
        $region22: #{complex_norm_wrapper_forward.3} parent=19 // pred_check_branch
          %130 = sbr.rel (%p128) target = $region24
        $region23: #{complex_norm_wrapper_forward.3} parent=19 // pred_region
          %p131 = scmp.lt.s32.totalorder %s16, 1
          %s132 = scalar_select %p131, %s16, 1
          %p133 = scmp.lt.s32.totalorder %s17, 0
          %s134 = scalar_select %p133, %s17, 0
          %s135 = smul.addr %s134, 4
          %s136 = smul.addr %s132, 4
          %s137 = sadd.s32 %s135, %s136
          %s138 = smul.addr %s137, 4
          %s139 = scalar_lea.vmem %s1, %s138
        $region24: #{complex_norm_wrapper_forward.3} parent=19 // pred_fallthru
          _
      $region20: #{complex_norm_wrapper_forward.3} parent=5 // pred_fallthru
        _
      %p140 = scmp.le.s32.totalorder 1, %s9
      %p141 = scmp.lt.s32.totalorder %s9, 3
      %p142 = pnand %p140, %p141
      %p143 = pneg %p142
      // Predicated region
      $region25: #{complex_norm_wrapper_forward.3} parent=5 // pred_check
        _
      $region26: #{complex_norm_wrapper_forward.3} parent=5 // pred_check_branch
        %145 = sbr.rel (%p142) target = $region28
      $region27: #{complex_norm_wrapper_forward.3} parent=5 // pred_region
        %s146 = ssub.s32 %s9, 1
        // Predicated region
        $region29: #{complex_norm_wrapper_forward.3} parent=27 // pred_check
          %p147 = pneg %p42
        $region30: #{complex_norm_wrapper_forward.3} parent=27 // pred_check_branch
          %149 = sbr.rel (%p147) target = $region32
        $region31: #{complex_norm_wrapper_forward.3} parent=27 // pred_region
          %150 = dma.done [#allocation3], 16
        $region32: #{complex_norm_wrapper_forward.3} parent=27 // pred_fallthru
          _
        %151 = sfence
        %p152 = pneg %p42
        %p153 = pneg %p39
        %p154 = scmp.lt.s32.totalorder %s18, 1
        %s155 = scalar_select %p154, %s18, 1
        %p156 = scmp.lt.s32.totalorder %s19, 0
        %s157 = scalar_select %p156, %s19, 0
        %s158 = smul.addr %s157, 4
        %s159 = smul.addr %s155, 4
        %s160 = sadd.s32 %s158, %s159
        %s161 = smul.addr %s160, 4
        %s162 = scalar_lea.vmem %s1, %s161
        %p163 = pneg %p70
        %p164 = pneg %p67
        %p165 = pneg %p98
        %p166 = pneg %p95
        %p167 = scmp.lt.s32.totalorder %s18, 1
        %s168 = scalar_select %p167, %s18, 1
        %p169 = scmp.lt.s32.totalorder %s19, 0
        %s170 = scalar_select %p169, %s19, 0
        %s171 = smul.addr %s170, 4
        %s172 = smul.addr %s168, 4
        %s173 = sadd.s32 %s171, %s172
        %s174 = smul.addr %s173, 4
        %s175 = scalar_lea.vmem %s2, %s174
        %p176 = scmp.lt.s32.totalorder %s18, 1
        %s177 = scalar_select %p176, %s18, 1
        %p178 = scmp.lt.s32.totalorder %s19, 0
        %s179 = scalar_select %p178, %s19, 0
        %s180 = smul.addr %s179, 4
        %s181 = smul.addr %s177, 4
        %s182 = sadd.s32 %s180, %s181
        %s183 = smul.addr %s182, 4
        %s184 = scalar_lea.vmem %s1, %s183
        %p185 = scmp.lt.s32.totalorder %s18, 1
        %s186 = scalar_select %p185, %s18, 1
        %p187 = scmp.lt.s32.totalorder %s19, 0
        %s188 = scalar_select %p187, %s19, 0
        %s189 = smul.addr %s188, 4
        %s190 = smul.addr %s186, 4
        %s191 = sadd.s32 %s189, %s190
        %s192 = smul.addr %s191, 4
        %s193 = scalar_lea.vmem %s2, %s192
        %s194 = smul.u32 %s18, 44
        %s195 = sld [smem:[#allocation2 + %s194]]
        %s196 = sadd.s32 %s194, 1
        %s197 = sld [smem:[#allocation2 + %s196]]
        %s198 = sadd.s32 %s194, 2
        %s199 = sld [smem:[#allocation2 + %s198]]
        %s200 = sadd.s32 %s194, 3
        %s201 = sld [smem:[#allocation2 + %s200]]
        %s202 = sadd.s32 %s194, 4
        %s203 = sld [smem:[#allocation2 + %s202]]
        %s204 = sadd.s32 %s194, 5
        %s205 = sld [smem:[#allocation2 + %s204]]
        %s206 = sadd.s32 %s194, 6
        %s207 = sld [smem:[#allocation2 + %s206]]
        %s208 = sadd.s32 %s194, 7
        %s209 = sld [smem:[#allocation2 + %s208]]
        %s210 = sadd.s32 %s194, 8
        %s211 = sld [smem:[#allocation2 + %s210]]
        %s212 = sadd.s32 %s194, 9
        %s213 = sld [smem:[#allocation2 + %s212]]
        %s214 = sadd.s32 %s194, 10
        %s215 = sld [smem:[#allocation2 + %s214]]
        %s216 = sadd.s32 %s194, 11
        %s217 = sld [smem:[#allocation2 + %s216]]
        %s218 = sadd.s32 %s194, 12
        %s219 = sld [smem:[#allocation2 + %s218]]
        %s220 = sadd.s32 %s194, 13
        %s221 = sld [smem:[#allocation2 + %s220]]
        %s222 = sadd.s32 %s194, 14
        %s223 = sld [smem:[#allocation2 + %s222]]
        %s224 = sadd.s32 %s194, 15
        %s225 = sld [smem:[#allocation2 + %s224]]
        %s226 = sadd.s32 %s194, 16
        %s227 = sld [smem:[#allocation2 + %s226]]
        %s228 = sadd.s32 %s194, 17
        %s229 = sld [smem:[#allocation2 + %s228]]
        %s230 = sadd.s32 %s194, 18
        %s231 = sld [smem:[#allocation2 + %s230]]
        %s232 = sadd.s32 %s194, 19
        %s233 = sld [smem:[#allocation2 + %s232]]
        %s234 = sadd.s32 %s194, 20
        %s235 = sld [smem:[#allocation2 + %s234]]
        %s236 = sadd.s32 %s194, 21
        %s237 = sld [smem:[#allocation2 + %s236]]
        %s238 = sadd.s32 %s194, 22
        %s239 = sld [smem:[#allocation2 + %s238]]
        %s240 = sadd.s32 %s194, 23
        %s241 = sld [smem:[#allocation2 + %s240]]
        %s242 = sadd.s32 %s194, 24
        %s243 = sld [smem:[#allocation2 + %s242]]
        %s244 = sadd.s32 %s194, 25
        %s245 = sld [smem:[#allocation2 + %s244]]
        %s246 = sadd.s32 %s194, 26
        %s247 = sld [smem:[#allocation2 + %s246]]
        %s248 = sadd.s32 %s194, 27
        %s249 = sld [smem:[#allocation2 + %s248]]
        %s250 = sadd.s32 %s194, 28
        %s251 = sld [smem:[#allocation2 + %s250]]
        %s252 = sadd.s32 %s194, 29
        %s253 = sld [smem:[#allocation2 + %s252]]
        %s254 = sadd.s32 %s194, 30
        %s255 = sld [smem:[#allocation2 + %s254]]
        %s256 = sadd.s32 %s194, 31
        %s257 = sld [smem:[#allocation2 + %s256]]
        %s258 = sadd.s32 %s194, 32
        %s259 = sld [smem:[#allocation2 + %s258]]
        %s260 = sadd.s32 %s194, 33
        %s261 = sld [smem:[#allocation2 + %s260]]
        %s262 = sadd.s32 %s194, 34
        %s263 = sld [smem:[#allocation2 + %s262]]
        %s264 = sadd.s32 %s194, 35
        %s265 = sld [smem:[#allocation2 + %s264]]
        %s266 = sadd.s32 %s194, 36
        %s267 = sld [smem:[#allocation2 + %s266]]
        %s268 = sadd.s32 %s194, 37
        %s269 = sld [smem:[#allocation2 + %s268]]
        %s270 = sadd.s32 %s194, 38
        %s271 = sld [smem:[#allocation2 + %s270]]
        %s272 = sadd.s32 %s194, 39
        %s273 = sld [smem:[#allocation2 + %s272]]
        %s274 = sadd.s32 %s194, 40
        %s275 = sld [smem:[#allocation2 + %s274]]
        %s276 = sadd.s32 %s194, 41
        %s277 = sld [smem:[#allocation2 + %s276]]
        %s278 = sadd.s32 %s194, 42
        %s279 = sld [smem:[#allocation2 + %s278]]
        %s280 = sadd.s32 %s194, 43
        %s281 = sld [smem:[#allocation2 + %s280]]
        %v282 = vld [vmem:[%s184] sm:$0xff]
        %v283 = vld [vmem:[%s184 + $0x8] sm:$0xff]
        %v284 = vlaneseq
        %v285 = vand.u32 %v284, 127
        %v286 = vadd.s32 %v285, 128
        %v287 = vadd.s32 %v285, 256
        %v288 = vadd.s32 %v285, 384
        %v289 = vand.u32 %v285, 1
        %v290 = vand.u32 %v286, 1
        %v291 = vand.u32 %v287, 1
        %v292 = vand.u32 %v288, 1
        %vm293 = vcmp.eq.s32.totalorder %v289, 0
        %vm294 = vcmp.eq.s32.totalorder %v290, 0
        %vm295 = vcmp.eq.s32.totalorder %v291, 0
        %vm296 = vcmp.eq.s32.totalorder %v292, 0
        %vm297 = vcmp.lt.s32.totalorder %v285, 0
        %v298 = vsub.s32 0, %v285
        %v299 = vsel %vm297, %v298, %v285
        %v300 = vshrl.u32 %v299, 5
        %v301 = vand.u32 %v299, 31
        %v302 = vsub.s32 0, %v301
        %v303 = vsel %vm297, %v302, %v301
        %vm304 = vcmp.lt.s32.totalorder %v286, 0
        %v305 = vsub.s32 0, %v286
        %v306 = vsel %vm304, %v305, %v286
        %v307 = vshrl.u32 %v306, 5
        %v308 = vand.u32 %v306, 31
        %v309 = vsub.s32 0, %v308
        %v310 = vsel %vm304, %v309, %v308
        %vm311 = vcmp.lt.s32.totalorder %v287, 0
        %v312 = vsub.s32 0, %v287
        %v313 = vsel %vm311, %v312, %v287
        %v314 = vshrl.u32 %v313, 5
        %v315 = vand.u32 %v313, 31
        %v316 = vsub.s32 0, %v315
        %v317 = vsel %vm311, %v316, %v315
        %vm318 = vcmp.lt.s32.totalorder %v288, 0
        %v319 = vsub.s32 0, %v288
        %v320 = vsel %vm318, %v319, %v288
        %v321 = vshrl.u32 %v320, 5
        %v322 = vand.u32 %v320, 31
        %v323 = vsub.s32 0, %v322
        %v324 = vsel %vm318, %v323, %v322
        %vm325 = vcmp.ne.s32.totalorder %v303, 0
        %vm326 = vcmp.ne.s32.totalorder %v310, 0
        %vm327 = vcmp.ne.s32.totalorder %v317, 0
        %vm328 = vcmp.ne.s32.totalorder %v324, 0
        %vm329 = vcmp.lt.s32.totalorder %v303, 0
        %vm330 = vcmp.lt.s32.totalorder %v310, 0
        %vm331 = vcmp.lt.s32.totalorder %v317, 0
        %vm332 = vcmp.lt.s32.totalorder %v324, 0
        %vm333 = vmand %vm329, %vm325
        %vm334 = vmand %vm330, %vm326
        %vm335 = vmand %vm331, %vm327
        %vm336 = vmand %vm332, %vm328
        %v337 = vadd.s32 %v303, 32
        %v338 = vadd.s32 %v310, 32
        %v339 = vadd.s32 %v317, 32
        %v340 = vadd.s32 %v324, 32
        %v341 = vsel %vm333, %v337, %v303
        %v342 = vsel %vm334, %v338, %v310
        %v343 = vsel %vm335, %v339, %v317
        %v344 = vsel %vm336, %v340, %v324
        %v345 = vstv %s195
        %v346 = vstv %s197
        %v347 = vsel %vm293, %v345, %v346
        %v348 = vsel %vm294, %v345, %v346
        %v349 = vsel %vm295, %v345, %v346
        %v350 = vsel %vm296, %v345, %v346
        %v351 = vstv %s199
        %v352 = vstv %s201
        %v353 = vsel %vm293, %v351, %v352
        %v354 = vsel %vm294, %v351, %v352
        %v355 = vsel %vm295, %v351, %v352
        %v356 = vsel %vm296, %v351, %v352
        %v357 = vstv %s203
        %v358 = vstv %s205
        %v359 = vsel %vm293, %v357, %v358
        %v360 = vsel %vm294, %v357, %v358
        %v361 = vsel %vm295, %v357, %v358
        %v362 = vsel %vm296, %v357, %v358
        %v363 = vstv %s279
        %v364 = vstv %s281
        %v365 = vsel %vm293, %v363, %v364
        %v366 = vsel %vm294, %v363, %v364
        %v367 = vsel %vm295, %v363, %v364
        %v368 = vsel %vm296, %v363, %v364
        %v369 = vstv %s207
        %v370 = vstv %s261
        %v371 = vsel %vm293, %v369, %v370
        %v372 = vsel %vm294, %v369, %v370
        %v373 = vsel %vm295, %v369, %v370
        %v374 = vsel %vm296, %v369, %v370
        %v375 = vstv %s209
        %v376 = vstv %s263
        %v377 = vsel %vm293, %v375, %v376
        %v378 = vsel %vm294, %v375, %v376
        %v379 = vsel %vm295, %v375, %v376
        %v380 = vsel %vm296, %v375, %v376
        %v381 = vstv %s211
        %v382 = vstv %s265
        %v383 = vsel %vm293, %v381, %v382
        %v384 = vsel %vm294, %v381, %v382
        %v385 = vsel %vm295, %v381, %v382
        %v386 = vsel %vm296, %v381, %v382
        %v387 = vstv %s213
        %v388 = vstv %s267
        %v389 = vsel %vm293, %v387, %v388
        %v390 = vsel %vm294, %v387, %v388
        %v391 = vsel %vm295, %v387, %v388
        %v392 = vsel %vm296, %v387, %v388
        %v393 = vstv %s215
        %v394 = vstv %s269
        %v395 = vsel %vm293, %v393, %v394
        %v396 = vsel %vm294, %v393, %v394
        %v397 = vsel %vm295, %v393, %v394
        %v398 = vsel %vm296, %v393, %v394
        %v399 = vstv %s217
        %v400 = vstv %s271
        %v401 = vsel %vm293, %v399, %v400
        %v402 = vsel %vm294, %v399, %v400
        %v403 = vsel %vm295, %v399, %v400
        %v404 = vsel %vm296, %v399, %v400
        %v405 = vstv %s219
        %v406 = vstv %s273
        %v407 = vsel %vm293, %v405, %v406
        %v408 = vsel %vm294, %v405, %v406
        %v409 = vsel %vm295, %v405, %v406
        %v410 = vsel %vm296, %v405, %v406
        %v411 = vstv %s221
        %v412 = vstv %s275
        %v413 = vsel %vm293, %v411, %v412
        %v414 = vsel %vm294, %v411, %v412
        %v415 = vsel %vm295, %v411, %v412
        %v416 = vsel %vm296, %v411, %v412
        %v417 = vstv %s223
        %v418 = vstv %s277
        %v419 = vsel %vm293, %v417, %v418
        %v420 = vsel %vm294, %v417, %v418
        %v421 = vsel %vm295, %v417, %v418
        %v422 = vsel %vm296, %v417, %v418
        %v423 = vstv %s225
        %v424 = vstv %s243
        %v425 = vsel %vm293, %v423, %v424
        %v426 = vsel %vm294, %v423, %v424
        %v427 = vsel %vm295, %v423, %v424
        %v428 = vsel %vm296, %v423, %v424
        %v429 = vstv %s227
        %v430 = vstv %s245
        %v431 = vsel %vm293, %v429, %v430
        %v432 = vsel %vm294, %v429, %v430
        %v433 = vsel %vm295, %v429, %v430
        %v434 = vsel %vm296, %v429, %v430
        %v435 = vstv %s229
        %v436 = vstv %s247
        %v437 = vsel %vm293, %v435, %v436
        %v438 = vsel %vm294, %v435, %v436
        %v439 = vsel %vm295, %v435, %v436
        %v440 = vsel %vm296, %v435, %v436
        %v441 = vstv %s231
        %v442 = vstv %s249
        %v443 = vsel %vm293, %v441, %v442
        %v444 = vsel %vm294, %v441, %v442
        %v445 = vsel %vm295, %v441, %v442
        %v446 = vsel %vm296, %v441, %v442
        %v447 = vstv %s233
        %v448 = vstv %s251
        %v449 = vsel %vm293, %v447, %v448
        %v450 = vsel %vm294, %v447, %v448
        %v451 = vsel %vm295, %v447, %v448
        %v452 = vsel %vm296, %v447, %v448
        %v453 = vstv %s235
        %v454 = vstv %s253
        %v455 = vsel %vm293, %v453, %v454
        %v456 = vsel %vm294, %v453, %v454
        %v457 = vsel %vm295, %v453, %v454
        %v458 = vsel %vm296, %v453, %v454
        %v459 = vstv %s237
        %v460 = vstv %s255
        %v461 = vsel %vm293, %v459, %v460
        %v462 = vsel %vm294, %v459, %v460
        %v463 = vsel %vm295, %v459, %v460
        %v464 = vsel %vm296, %v459, %v460
        %v465 = vstv %s239
        %v466 = vstv %s257
        %v467 = vsel %vm293, %v465, %v466
        %v468 = vsel %vm294, %v465, %v466
        %v469 = vsel %vm295, %v465, %v466
        %v470 = vsel %vm296, %v465, %v466
        %v471 = vstv %s241
        %v472 = vstv %s259
        %v473 = vsel %vm293, %v471, %v472
        %v474 = vsel %vm294, %v471, %v472
        %v475 = vsel %vm295, %v471, %v472
        %v476 = vsel %vm296, %v471, %v472
        %vm477 = vcmp.ge.s32.totalorder %v285, 32
        %vm478 = vcmp.ge.s32.totalorder %v286, 32
        %vm479 = vcmp.ge.s32.totalorder %v287, 32
        %vm480 = vcmp.ge.s32.totalorder %v288, 32
        %vm481 = vcmp.lt.s32.totalorder %v285, 480
        %vm482 = vcmp.lt.s32.totalorder %v286, 480
        %vm483 = vcmp.lt.s32.totalorder %v287, 480
        %vm484 = vcmp.lt.s32.totalorder %v288, 480
        %vm485 = vcmp.ge.s32.totalorder %v341, 2
        %vm486 = vcmp.ge.s32.totalorder %v342, 2
        %vm487 = vcmp.ge.s32.totalorder %v343, 2
        %vm488 = vcmp.ge.s32.totalorder %v344, 2
        %vm489 = vcmp.lt.s32.totalorder %v341, 30
        %vm490 = vcmp.lt.s32.totalorder %v342, 30
        %vm491 = vcmp.lt.s32.totalorder %v343, 30
        %vm492 = vcmp.lt.s32.totalorder %v344, 30
        %v495 = vcombine.high %v282, %v282
        %v496 = vcombine.high %v283, %v283
        %499 = vrot.lane.b32.xlu0 %v282, 1
        %v500 = vpop.permute.xlu0 %499
        %501 = vrot.lane.b32.xlu0 %v495, 1
        %v502 = vpop.permute.xlu0 %501
        %503 = vrot.lane.b32.xlu0 %v283, 1
        %v504 = vpop.permute.xlu0 %503
        %505 = vrot.lane.b32.xlu0 %v496, 1
        %v506 = vpop.permute.xlu0 %505
        %vm507 = vcmp.lt.s32.totalorder %v285, 1
        %v508 = vsel %vm507, %v504, %v506
        %v509 = vsel %vm507, %v502, %v504
        %v510 = vsel %vm507, %v500, %v502
        %v511 = vsel %vm507, %v506, %v500
        %512 = vrot.lane.b32.xlu0 %v282, 127
        %v513 = vpop.permute.xlu0 %512
        %514 = vrot.lane.b32.xlu0 %v495, 127
        %v515 = vpop.permute.xlu0 %514
        %516 = vrot.lane.b32.xlu0 %v283, 127
        %v517 = vpop.permute.xlu0 %516
        %518 = vrot.lane.b32.xlu0 %v496, 127
        %v519 = vpop.permute.xlu0 %518
        %vm520 = vcmp.lt.s32.totalorder %v285, 127
        %v521 = vsel %vm520, %v517, %v519
        %v522 = vsel %vm520, %v515, %v517
        %v523 = vsel %vm520, %v513, %v515
        %v524 = vsel %vm520, %v519, %v513
        %v525 = vsel %vm293, 1, 0
        %v526 = vsel %vm294, 1, 0
        %v527 = vsel %vm295, 1, 0
        %v528 = vsel %vm296, 1, 0
        %vm529 = vcmp.eq.s32.totalorder %v525, 1
        %vm530 = vcmp.eq.s32.totalorder %v526, 1
        %vm531 = vcmp.eq.s32.totalorder %v527, 1
        %vm532 = vcmp.eq.s32.totalorder %v528, 1
        %v533 = vsel %vm529, %v523, %v511
        %v534 = vsel %vm530, %v522, %v510
        %v535 = vsel %vm531, %v521, %v509
        %v536 = vsel %vm532, %v524, %v508
        %v537 = vmul.f32 %v347, %v282
        %v538 = vmul.f32 %v348, %v495
        %v539 = vmul.f32 %v349, %v283
        %v540 = vmul.f32 %v350, %v496
        %v541 = vmul.f32 %v353, %v533
        %v542 = vmul.f32 %v354, %v534
        %v543 = vmul.f32 %v355, %v535
        %v544 = vmul.f32 %v356, %v536
        %v545 = vadd.f32 %v537, %v541
        %v546 = vadd.f32 %v538, %v542
        %v547 = vadd.f32 %v539, %v543
        %v548 = vadd.f32 %v540, %v544
        %v549 = vadd.f32 %v545, %v359
        %v550 = vadd.f32 %v546, %v360
        %v551 = vadd.f32 %v547, %v361
        %v552 = vadd.f32 %v548, %v362
        %v553 = vmax.f32 %v549, -6.0
        %v554 = vmax.f32 %v550, -6.0
        %v555 = vmax.f32 %v551, -6.0
        %v556 = vmax.f32 %v552, -6.0
        %v557 = vmin.f32 %v553, 6.0
        %v558 = vmin.f32 %v554, 6.0
        %v559 = vmin.f32 %v555, 6.0
        %v560 = vmin.f32 %v556, 6.0
        %561 = vrot.lane.b32.xlu0 %v557, 1
        %v562 = vpop.permute.xlu0 %561
        %563 = vrot.lane.b32.xlu0 %v558, 1
        %v564 = vpop.permute.xlu0 %563
        %565 = vrot.lane.b32.xlu0 %v559, 1
        %v566 = vpop.permute.xlu0 %565
        %567 = vrot.lane.b32.xlu0 %v560, 1
        %v568 = vpop.permute.xlu0 %567
        %v569 = vsel %vm507, %v566, %v568
        %v570 = vsel %vm507, %v564, %v566
        %v571 = vsel %vm507, %v562, %v564
        %v572 = vsel %vm507, %v568, %v562
        %573 = vrot.lane.b32.xlu0 %v557, 127
        %v574 = vpop.permute.xlu0 %573
        %575 = vrot.lane.b32.xlu0 %v558, 127
        %v576 = vpop.permute.xlu0 %575
        %577 = vrot.lane.b32.xlu0 %v559, 127
        %v578 = vpop.permute.xlu0 %577
        %579 = vrot.lane.b32.xlu0 %v560, 127
        %v580 = vpop.permute.xlu0 %579
        %v581 = vsel %vm520, %v578, %v580
        %v582 = vsel %vm520, %v576, %v578
        %v583 = vsel %vm520, %v574, %v576
        %v584 = vsel %vm520, %v580, %v574
        %v585 = vsel %vm529, %v583, %v572
        %v586 = vsel %vm530, %v582, %v571
        %v587 = vsel %vm531, %v581, %v570
        %v588 = vsel %vm532, %v584, %v569
        %v589 = vmul.f32 %v395, %v557
        %v590 = vmul.f32 %v396, %v558
        %v591 = vmul.f32 %v397, %v559
        %v592 = vmul.f32 %v398, %v560
        %v593 = vmul.f32 %v449, %v585
        %v594 = vmul.f32 %v450, %v586
        %v595 = vmul.f32 %v451, %v587
        %v596 = vmul.f32 %v452, %v588
        %v597 = vadd.f32 %v589, %v593
        %v598 = vadd.f32 %v590, %v594
        %v599 = vadd.f32 %v591, %v595
        %v600 = vadd.f32 %v592, %v596
        %601 = vrot.lane.b32.xlu0 %v557, 34
        %v602 = vpop.permute.xlu0 %601
        %603 = vrot.lane.b32.xlu0 %v558, 34
        %v604 = vpop.permute.xlu0 %603
        %605 = vrot.lane.b32.xlu0 %v559, 34
        %v606 = vpop.permute.xlu0 %605
        %607 = vrot.lane.b32.xlu0 %v560, 34
        %v608 = vpop.permute.xlu0 %607
        %vm609 = vcmp.lt.s32.totalorder %v285, 34
        %v610 = vsel %vm609, %v606, %v608
        %v611 = vsel %vm609, %v604, %v606
        %v612 = vsel %vm609, %v602, %v604
        %v613 = vsel %vm609, %v608, %v602
        %614 = vrot.lane.b32.xlu0 %v585, 34
        %v615 = vpop.permute.xlu0 %614
        %616 = vrot.lane.b32.xlu0 %v586, 34
        %v617 = vpop.permute.xlu0 %616
        %618 = vrot.lane.b32.xlu0 %v587, 34
        %v619 = vpop.permute.xlu0 %618
        %620 = vrot.lane.b32.xlu0 %v588, 34
        %v621 = vpop.permute.xlu0 %620
        %v622 = vsel %vm609, %v619, %v621
        %v623 = vsel %vm609, %v617, %v619
        %v624 = vsel %vm609, %v615, %v617
        %v625 = vsel %vm609, %v621, %v615
        %vm626 = vmand %vm477, %vm485
        %vm627 = vmand %vm478, %vm486
        %vm628 = vmand %vm479, %vm487
        %vm629 = vmand %vm480, %vm488
        %v630 = vmul.f32 %v371, %v613
        %v631 = vmul.f32 %v372, %v612
        %v632 = vmul.f32 %v373, %v611
        %v633 = vmul.f32 %v374, %v610
        %v634 = vmul.f32 %v425, %v625
        %v635 = vmul.f32 %v426, %v624
        %v636 = vmul.f32 %v427, %v623
        %v637 = vmul.f32 %v428, %v622
        %v638 = vadd.f32 %v630, %v634
        %v639 = vadd.f32 %v631, %v635
        %v640 = vadd.f32 %v632, %v636
        %v641 = vadd.f32 %v633, %v637
        %v642 = vsel %vm626, 1, 0
        %v643 = vsel %vm627, 1, 0
        %v644 = vsel %vm628, 1, 0
        %v645 = vsel %vm629, 1, 0
        %vm646 = vcmp.eq.s32.totalorder %v642, 1
        %vm647 = vcmp.eq.s32.totalorder %v643, 1
        %vm648 = vcmp.eq.s32.totalorder %v644, 1
        %vm649 = vcmp.eq.s32.totalorder %v645, 1
        %v650 = vsel %vm646, %v638, 0.0
        %v651 = vsel %vm647, %v639, 0.0
        %v652 = vsel %vm648, %v640, 0.0
        %v653 = vsel %vm649, %v641, 0.0
        %v654 = vadd.f32 %v597, %v650
        %v655 = vadd.f32 %v598, %v651
        %v656 = vadd.f32 %v599, %v652
        %v657 = vadd.f32 %v600, %v653
        %658 = vrot.lane.b32.xlu0 %v557, 32
        %v659 = vpop.permute.xlu0 %658
        %660 = vrot.lane.b32.xlu0 %v558, 32
        %v661 = vpop.permute.xlu0 %660
        %662 = vrot.lane.b32.xlu0 %v559, 32
        %v663 = vpop.permute.xlu0 %662
        %664 = vrot.lane.b32.xlu0 %v560, 32
        %v665 = vpop.permute.xlu0 %664
        %vm666 = vcmp.lt.s32.totalorder %v285, 32
        %v667 = vsel %vm666, %v663, %v665
        %v668 = vsel %vm666, %v661, %v663
        %v669 = vsel %vm666, %v659, %v661
        %v670 = vsel %vm666, %v665, %v659
        %671 = vrot.lane.b32.xlu0 %v585, 32
        %v672 = vpop.permute.xlu0 %671
        %673 = vrot.lane.b32.xlu0 %v586, 32
        %v674 = vpop.permute.xlu0 %673
        %675 = vrot.lane.b32.xlu0 %v587, 32
        %v676 = vpop.permute.xlu0 %675
        %677 = vrot.lane.b32.xlu0 %v588, 32
        %v678 = vpop.permute.xlu0 %677
        %v679 = vsel %vm666, %v676, %v678
        %v680 = vsel %vm666, %v674, %v676
        %v681 = vsel %vm666, %v672, %v674
        %v682 = vsel %vm666, %v678, %v672
        %v683 = vmul.f32 %v377, %v670
        %v684 = vmul.f32 %v378, %v669
        %v685 = vmul.f32 %v379, %v668
        %v686 = vmul.f32 %v380, %v667
        %v687 = vmul.f32 %v431, %v682
        %v688 = vmul.f32 %v432, %v681
        %v689 = vmul.f32 %v433, %v680
        %v690 = vmul.f32 %v434, %v679
        %v691 = vadd.f32 %v683, %v687
        %v692 = vadd.f32 %v684, %v688
        %v693 = vadd.f32 %v685, %v689
        %v694 = vadd.f32 %v686, %v690
        %v695 = vsel %vm477, 1, 0
        %v696 = vsel %vm478, 1, 0
        %v697 = vsel %vm479, 1, 0
        %v698 = vsel %vm480, 1, 0
        %vm699 = vcmp.eq.s32.totalorder %v695, 1
        %vm700 = vcmp.eq.s32.totalorder %v696, 1
        %vm701 = vcmp.eq.s32.totalorder %v697, 1
        %vm702 = vcmp.eq.s32.totalorder %v698, 1
        %v703 = vsel %vm699, %v691, 0.0
        %v704 = vsel %vm700, %v692, 0.0
        %v705 = vsel %vm701, %v693, 0.0
        %v706 = vsel %vm702, %v694, 0.0
        %v707 = vadd.f32 %v654, %v703
        %v708 = vadd.f32 %v655, %v704
        %v709 = vadd.f32 %v656, %v705
        %v710 = vadd.f32 %v657, %v706
        %711 = vrot.lane.b32.xlu0 %v557, 30
        %v712 = vpop.permute.xlu0 %711
        %713 = vrot.lane.b32.xlu0 %v558, 30
        %v714 = vpop.permute.xlu0 %713
        %715 = vrot.lane.b32.xlu0 %v559, 30
        %v716 = vpop.permute.xlu0 %715
        %717 = vrot.lane.b32.xlu0 %v560, 30
        %v718 = vpop.permute.xlu0 %717
        %vm719 = vcmp.lt.s32.totalorder %v285, 30
        %v720 = vsel %vm719, %v716, %v718
        %v721 = vsel %vm719, %v714, %v716
        %v722 = vsel %vm719, %v712, %v714
        %v723 = vsel %vm719, %v718, %v712
        %724 = vrot.lane.b32.xlu0 %v585, 30
        %v725 = vpop.permute.xlu0 %724
        %726 = vrot.lane.b32.xlu0 %v586, 30
        %v727 = vpop.permute.xlu0 %726
        %728 = vrot.lane.b32.xlu0 %v587, 30
        %v729 = vpop.permute.xlu0 %728
        %730 = vrot.lane.b32.xlu0 %v588, 30
        %v731 = vpop.permute.xlu0 %730
        %v732 = vsel %vm719, %v729, %v731
        %v733 = vsel %vm719, %v727, %v729
        %v734 = vsel %vm719, %v725, %v727
        %v735 = vsel %vm719, %v731, %v725
        %vm736 = vmand %vm477, %vm489
        %vm737 = vmand %vm478, %vm490
        %vm738 = vmand %vm479, %vm491
        %vm739 = vmand %vm480, %vm492
        %v740 = vmul.f32 %v383, %v723
        %v741 = vmul.f32 %v384, %v722
        %v742 = vmul.f32 %v385, %v721
        %v743 = vmul.f32 %v386, %v720
        %v744 = vmul.f32 %v437, %v735
        %v745 = vmul.f32 %v438, %v734
        %v746 = vmul.f32 %v439, %v733
        %v747 = vmul.f32 %v440, %v732
        %v748 = vadd.f32 %v740, %v744
        %v749 = vadd.f32 %v741, %v745
        %v750 = vadd.f32 %v742, %v746
        %v751 = vadd.f32 %v743, %v747
        %v752 = vsel %vm736, 1, 0
        %v753 = vsel %vm737, 1, 0
        %v754 = vsel %vm738, 1, 0
        %v755 = vsel %vm739, 1, 0
        %vm756 = vcmp.eq.s32.totalorder %v752, 1
        %vm757 = vcmp.eq.s32.totalorder %v753, 1
        %vm758 = vcmp.eq.s32.totalorder %v754, 1
        %vm759 = vcmp.eq.s32.totalorder %v755, 1
        %v760 = vsel %vm756, %v748, 0.0
        %v761 = vsel %vm757, %v749, 0.0
        %v762 = vsel %vm758, %v750, 0.0
        %v763 = vsel %vm759, %v751, 0.0
        %v764 = vadd.f32 %v707, %v760
        %v765 = vadd.f32 %v708, %v761
        %v766 = vadd.f32 %v709, %v762
        %v767 = vadd.f32 %v710, %v763
        %768 = vrot.lane.b32.xlu0 %v557, 2
        %v769 = vpop.permute.xlu0 %768
        %770 = vrot.lane.b32.xlu0 %v558, 2
        %v771 = vpop.permute.xlu0 %770
        %772 = vrot.lane.b32.xlu0 %v559, 2
        %v773 = vpop.permute.xlu0 %772
        %774 = vrot.lane.b32.xlu0 %v560, 2
        %v775 = vpop.permute.xlu0 %774
        %vm776 = vcmp.lt.s32.totalorder %v285, 2
        %v777 = vsel %vm776, %v773, %v775
        %v778 = vsel %vm776, %v771, %v773
        %v779 = vsel %vm776, %v769, %v771
        %v780 = vsel %vm776, %v775, %v769
        %781 = vrot.lane.b32.xlu0 %v585, 2
        %v782 = vpop.permute.xlu0 %781
        %783 = vrot.lane.b32.xlu0 %v586, 2
        %v784 = vpop.permute.xlu0 %783
        %785 = vrot.lane.b32.xlu0 %v587, 2
        %v786 = vpop.permute.xlu0 %785
        %787 = vrot.lane.b32.xlu0 %v588, 2
        %v788 = vpop.permute.xlu0 %787
        %v789 = vsel %vm776, %v786, %v788
        %v790 = vsel %vm776, %v784, %v786
        %v791 = vsel %vm776, %v782, %v784
        %v792 = vsel %vm776, %v788, %v782
        %v793 = vmul.f32 %v389, %v780
        %v794 = vmul.f32 %v390, %v779
        %v795 = vmul.f32 %v391, %v778
        %v796 = vmul.f32 %v392, %v777
        %v797 = vmul.f32 %v443, %v792
        %v798 = vmul.f32 %v444, %v791
        %v799 = vmul.f32 %v445, %v790
        %v800 = vmul.f32 %v446, %v789
        %v801 = vadd.f32 %v793, %v797
        %v802 = vadd.f32 %v794, %v798
        %v803 = vadd.f32 %v795, %v799
        %v804 = vadd.f32 %v796, %v800
        %v805 = vsel %vm485, 1, 0
        %v806 = vsel %vm486, 1, 0
        %v807 = vsel %vm487, 1, 0
        %v808 = vsel %vm488, 1, 0
        %vm809 = vcmp.eq.s32.totalorder %v805, 1
        %vm810 = vcmp.eq.s32.totalorder %v806, 1
        %vm811 = vcmp.eq.s32.totalorder %v807, 1
        %vm812 = vcmp.eq.s32.totalorder %v808, 1
        %v813 = vsel %vm809, %v801, 0.0
        %v814 = vsel %vm810, %v802, 0.0
        %v815 = vsel %vm811, %v803, 0.0
        %v816 = vsel %vm812, %v804, 0.0
        %v817 = vadd.f32 %v764, %v813
        %v818 = vadd.f32 %v765, %v814
        %v819 = vadd.f32 %v766, %v815
        %v820 = vadd.f32 %v767, %v816
        %821 = vrot.lane.b32.xlu0 %v557, 126
        %v822 = vpop.permute.xlu0 %821
        %823 = vrot.lane.b32.xlu0 %v558, 126
        %v824 = vpop.permute.xlu0 %823
        %825 = vrot.lane.b32.xlu0 %v559, 126
        %v826 = vpop.permute.xlu0 %825
        %827 = vrot.lane.b32.xlu0 %v560, 126
        %v828 = vpop.permute.xlu0 %827
        %vm829 = vcmp.lt.s32.totalorder %v285, 126
        %v830 = vsel %vm829, %v826, %v828
        %v831 = vsel %vm829, %v824, %v826
        %v832 = vsel %vm829, %v822, %v824
        %v833 = vsel %vm829, %v828, %v822
        %834 = vrot.lane.b32.xlu0 %v585, 126
        %v835 = vpop.permute.xlu0 %834
        %836 = vrot.lane.b32.xlu0 %v586, 126
        %v837 = vpop.permute.xlu0 %836
        %838 = vrot.lane.b32.xlu0 %v587, 126
        %v839 = vpop.permute.xlu0 %838
        %840 = vrot.lane.b32.xlu0 %v588, 126
        %v841 = vpop.permute.xlu0 %840
        %v842 = vsel %vm829, %v839, %v841
        %v843 = vsel %vm829, %v837, %v839
        %v844 = vsel %vm829, %v835, %v837
        %v845 = vsel %vm829, %v841, %v835
        %v846 = vmul.f32 %v401, %v832
        %v847 = vmul.f32 %v402, %v831
        %v848 = vmul.f32 %v403, %v830
        %v849 = vmul.f32 %v404, %v833
        %v850 = vmul.f32 %v455, %v844
        %v851 = vmul.f32 %v456, %v843
        %v852 = vmul.f32 %v457, %v842
        %v853 = vmul.f32 %v458, %v845
        %v854 = vadd.f32 %v846, %v850
        %v855 = vadd.f32 %v847, %v851
        %v856 = vadd.f32 %v848, %v852
        %v857 = vadd.f32 %v849, %v853
        %v858 = vsel %vm489, 1, 0
        %v859 = vsel %vm490, 1, 0
        %v860 = vsel %vm491, 1, 0
        %v861 = vsel %vm492, 1, 0
        %vm862 = vcmp.eq.s32.totalorder %v858, 1
        %vm863 = vcmp.eq.s32.totalorder %v859, 1
        %vm864 = vcmp.eq.s32.totalorder %v860, 1
        %vm865 = vcmp.eq.s32.totalorder %v861, 1
        %v866 = vsel %vm862, %v854, 0.0
        %v867 = vsel %vm863, %v855, 0.0
        %v868 = vsel %vm864, %v856, 0.0
        %v869 = vsel %vm865, %v857, 0.0
        %v870 = vadd.f32 %v817, %v866
        %v871 = vadd.f32 %v818, %v867
        %v872 = vadd.f32 %v819, %v868
        %v873 = vadd.f32 %v820, %v869
        %874 = vrot.lane.b32.xlu0 %v557, 98
        %v875 = vpop.permute.xlu0 %874
        %876 = vrot.lane.b32.xlu0 %v558, 98
        %v877 = vpop.permute.xlu0 %876
        %878 = vrot.lane.b32.xlu0 %v559, 98
        %v879 = vpop.permute.xlu0 %878
        %880 = vrot.lane.b32.xlu0 %v560, 98
        %v881 = vpop.permute.xlu0 %880
        %vm882 = vcmp.lt.s32.totalorder %v285, 98
        %v883 = vsel %vm882, %v879, %v881
        %v884 = vsel %vm882, %v877, %v879
        %v885 = vsel %vm882, %v875, %v877
        %v886 = vsel %vm882, %v881, %v875
        %887 = vrot.lane.b32.xlu0 %v585, 98
        %v888 = vpop.permute.xlu0 %887
        %889 = vrot.lane.b32.xlu0 %v586, 98
        %v890 = vpop.permute.xlu0 %889
        %891 = vrot.lane.b32.xlu0 %v587, 98
        %v892 = vpop.permute.xlu0 %891
        %893 = vrot.lane.b32.xlu0 %v588, 98
        %v894 = vpop.permute.xlu0 %893
        %v895 = vsel %vm882, %v892, %v894
        %v896 = vsel %vm882, %v890, %v892
        %v897 = vsel %vm882, %v888, %v890
        %v898 = vsel %vm882, %v894, %v888
        %vm899 = vmand %vm481, %vm485
        %vm900 = vmand %vm482, %vm486
        %vm901 = vmand %vm483, %vm487
        %vm902 = vmand %vm484, %vm488
        %v903 = vmul.f32 %v407, %v885
        %v904 = vmul.f32 %v408, %v884
        %v905 = vmul.f32 %v409, %v883
        %v906 = vmul.f32 %v410, %v886
        %v907 = vmul.f32 %v461, %v897
        %v908 = vmul.f32 %v462, %v896
        %v909 = vmul.f32 %v463, %v895
        %v910 = vmul.f32 %v464, %v898
        %v911 = vadd.f32 %v903, %v907
        %v912 = vadd.f32 %v904, %v908
        %v913 = vadd.f32 %v905, %v909
        %v914 = vadd.f32 %v906, %v910
        %v915 = vsel %vm899, 1, 0
        %v916 = vsel %vm900, 1, 0
        %v917 = vsel %vm901, 1, 0
        %v918 = vsel %vm902, 1, 0
        %vm919 = vcmp.eq.s32.totalorder %v915, 1
        %vm920 = vcmp.eq.s32.totalorder %v916, 1
        %vm921 = vcmp.eq.s32.totalorder %v917, 1
        %vm922 = vcmp.eq.s32.totalorder %v918, 1
        %v923 = vsel %vm919, %v911, 0.0
        %v924 = vsel %vm920, %v912, 0.0
        %v925 = vsel %vm921, %v913, 0.0
        %v926 = vsel %vm922, %v914, 0.0
        %v927 = vadd.f32 %v870, %v923
        %v928 = vadd.f32 %v871, %v924
        %v929 = vadd.f32 %v872, %v925
        %v930 = vadd.f32 %v873, %v926
        %931 = vrot.lane.b32.xlu0 %v557, 96
        %v932 = vpop.permute.xlu0 %931
        %933 = vrot.lane.b32.xlu0 %v558, 96
        %v934 = vpop.permute.xlu0 %933
        %935 = vrot.lane.b32.xlu0 %v559, 96
        %v936 = vpop.permute.xlu0 %935
        %937 = vrot.lane.b32.xlu0 %v560, 96
        %v938 = vpop.permute.xlu0 %937
        %vm939 = vcmp.lt.s32.totalorder %v285, 96
        %v940 = vsel %vm939, %v936, %v938
        %v941 = vsel %vm939, %v934, %v936
        %v942 = vsel %vm939, %v932, %v934
        %v943 = vsel %vm939, %v938, %v932
        %944 = vrot.lane.b32.xlu0 %v585, 96
        %v945 = vpop.permute.xlu0 %944
        %946 = vrot.lane.b32.xlu0 %v586, 96
        %v947 = vpop.permute.xlu0 %946
        %948 = vrot.lane.b32.xlu0 %v587, 96
        %v949 = vpop.permute.xlu0 %948
        %950 = vrot.lane.b32.xlu0 %v588, 96
        %v951 = vpop.permute.xlu0 %950
        %v952 = vsel %vm939, %v949, %v951
        %v953 = vsel %vm939, %v947, %v949
        %v954 = vsel %vm939, %v945, %v947
        %v955 = vsel %vm939, %v951, %v945
        %v956 = vmul.f32 %v413, %v942
        %v957 = vmul.f32 %v414, %v941
        %v958 = vmul.f32 %v415, %v940
        %v959 = vmul.f32 %v416, %v943
        %v960 = vmul.f32 %v467, %v954
        %v961 = vmul.f32 %v468, %v953
        %v962 = vmul.f32 %v469, %v952
        %v963 = vmul.f32 %v470, %v955
        %v964 = vadd.f32 %v956, %v960
        %v965 = vadd.f32 %v957, %v961
        %v966 = vadd.f32 %v958, %v962
        %v967 = vadd.f32 %v959, %v963
        %v968 = vsel %vm481, 1, 0
        %v969 = vsel %vm482, 1, 0
        %v970 = vsel %vm483, 1, 0
        %v971 = vsel %vm484, 1, 0
        %vm972 = vcmp.eq.s32.totalorder %v968, 1
        %vm973 = vcmp.eq.s32.totalorder %v969, 1
        %vm974 = vcmp.eq.s32.totalorder %v970, 1
        %vm975 = vcmp.eq.s32.totalorder %v971, 1
        %v976 = vsel %vm972, %v964, 0.0
        %v977 = vsel %vm973, %v965, 0.0
        %v978 = vsel %vm974, %v966, 0.0
        %v979 = vsel %vm975, %v967, 0.0
        %v980 = vadd.f32 %v927, %v976
        %v981 = vadd.f32 %v928, %v977
        %v982 = vadd.f32 %v929, %v978
        %v983 = vadd.f32 %v930, %v979
        %984 = vrot.lane.b32.xlu0 %v557, 94
        %v985 = vpop.permute.xlu0 %984
        %986 = vrot.lane.b32.xlu0 %v558, 94
        %v987 = vpop.permute.xlu0 %986
        %988 = vrot.lane.b32.xlu0 %v559, 94
        %v989 = vpop.permute.xlu0 %988
        %990 = vrot.lane.b32.xlu0 %v560, 94
        %v991 = vpop.permute.xlu0 %990
        %vm992 = vcmp.lt.s32.totalorder %v285, 94
        %v993 = vsel %vm992, %v989, %v991
        %v994 = vsel %vm992, %v987, %v989
        %v995 = vsel %vm992, %v985, %v987
        %v996 = vsel %vm992, %v991, %v985
        %997 = vrot.lane.b32.xlu0 %v585, 94
        %v998 = vpop.permute.xlu0 %997
        %999 = vrot.lane.b32.xlu0 %v586, 94
        %v1000 = vpop.permute.xlu0 %999
        %1001 = vrot.lane.b32.xlu0 %v587, 94
        %v1002 = vpop.permute.xlu0 %1001
        %1003 = vrot.lane.b32.xlu0 %v588, 94
        %v1004 = vpop.permute.xlu0 %1003
        %v1005 = vsel %vm992, %v1002, %v1004
        %v1006 = vsel %vm992, %v1000, %v1002
        %v1007 = vsel %vm992, %v998, %v1000
        %v1008 = vsel %vm992, %v1004, %v998
        %vm1009 = vmand %vm481, %vm489
        %vm1010 = vmand %vm482, %vm490
        %vm1011 = vmand %vm483, %vm491
        %vm1012 = vmand %vm484, %vm492
        %v1013 = vmul.f32 %v419, %v995
        %v1014 = vmul.f32 %v420, %v994
        %v1015 = vmul.f32 %v421, %v993
        %v1016 = vmul.f32 %v422, %v996
        %v1017 = vmul.f32 %v473, %v1007
        %v1018 = vmul.f32 %v474, %v1006
        %v1019 = vmul.f32 %v475, %v1005
        %v1020 = vmul.f32 %v476, %v1008
        %v1021 = vadd.f32 %v1013, %v1017
        %v1022 = vadd.f32 %v1014, %v1018
        %v1023 = vadd.f32 %v1015, %v1019
        %v1024 = vadd.f32 %v1016, %v1020
        %v1025 = vsel %vm1009, 1, 0
        %v1026 = vsel %vm1010, 1, 0
        %v1027 = vsel %vm1011, 1, 0
        %v1028 = vsel %vm1012, 1, 0
        %vm1029 = vcmp.eq.s32.totalorder %v1025, 1
        %vm1030 = vcmp.eq.s32.totalorder %v1026, 1
        %vm1031 = vcmp.eq.s32.totalorder %v1027, 1
        %vm1032 = vcmp.eq.s32.totalorder %v1028, 1
        %v1033 = vsel %vm1029, %v1021, 0.0
        %v1034 = vsel %vm1030, %v1022, 0.0
        %v1035 = vsel %vm1031, %v1023, 0.0
        %v1036 = vsel %vm1032, %v1024, 0.0
        %v1037 = vadd.f32 %v980, %v1033
        %v1038 = vadd.f32 %v981, %v1034
        %v1039 = vadd.f32 %v982, %v1035
        %v1040 = vadd.f32 %v983, %v1036
        %v1041 = vadd.f32 %v1037, %v365
        %v1042 = vadd.f32 %v1038, %v366
        %v1043 = vadd.f32 %v1039, %v367
        %v1044 = vadd.f32 %v1040, %v368
        %v1049 = vcombine.low %v1041, %v1042
        %v1050 = vcombine.low %v1043, %v1044
        %1053 = vst [vmem:[%s193] sm:$0xff] %v1049
        %1054 = vst [vmem:[%s193 + $0x8] sm:$0xff] %v1050
        %p1055 = scmp.lt.s32.totalorder %s18, 1
        %s1056 = scalar_select %p1055, %s18, 1
        %p1057 = scmp.lt.s32.totalorder %s19, 0
        %s1058 = scalar_select %p1057, %s19, 0
        %s1059 = smul.addr %s1058, 4
        %s1060 = smul.addr %s1056, 4
        %s1061 = sadd.s32 %s1059, %s1060
        %s1062 = smul.addr %s1061, 4
        %s1063 = scalar_lea.vmem %s2, %s1062
        // Predicated region
        $region33: #{complex_norm_wrapper_forward.3} parent=27 // pred_check
          %p1064 = pneg %p95
        $region34: #{complex_norm_wrapper_forward.3} parent=27 // pred_check_branch
          %1066 = sbr.rel (%p1064) target = $region36
        $region35: #{complex_norm_wrapper_forward.3} parent=27 // pred_region
          _
        $region36: #{complex_norm_wrapper_forward.3} parent=27 // pred_fallthru
          _
      $region28: #{complex_norm_wrapper_forward.3} parent=5 // pred_fallthru
        _
      %p1067 = scmp.le.s32.totalorder 2, %s9
      // Predicated region
      $region37: #{complex_norm_wrapper_forward.3} parent=5 // pred_check
        %p1068 = pneg %p1067
      $region38: #{complex_norm_wrapper_forward.3} parent=5 // pred_check_branch
        %1070 = sbr.rel (%p1068) target = $region40
      $region39: #{complex_norm_wrapper_forward.3} parent=5 // pred_region
        %s1071 = ssub.s32 %s9, 2
        // Predicated region
        $region41: #{complex_norm_wrapper_forward.3} parent=39 // pred_check
          %p1072 = pneg %p101
        $region42: #{complex_norm_wrapper_forward.3} parent=39 // pred_check_branch
          %1074 = sbr.rel (%p1072) target = $region44
        $region43: #{complex_norm_wrapper_forward.3} parent=39 // pred_region
          %p1075 = scmp.lt.s32.totalorder %s20, 1
          %s1076 = scalar_select %p1075, %s20, 1
          %p1077 = scmp.lt.s32.totalorder %s21, 0
          %s1078 = scalar_select %p1077, %s21, 0
          %s1079 = smul.addr %s1078, 4
          %s1080 = smul.addr %s1076, 4
          %s1081 = sadd.s32 %s1079, %s1080
          %s1082 = smul.addr %s1081, 4
          %s1083 = scalar_lea.vmem %s2, %s1082
        $region44: #{complex_norm_wrapper_forward.3} parent=39 // pred_fallthru
          _
      $region40: #{complex_norm_wrapper_forward.3} parent=5 // pred_fallthru
        _
    $region6: #{complex_norm_wrapper_forward.3} parent=1 // loop_footer
      %s13 = sadd.s32 1, %s9
    $region7: #{complex_norm_wrapper_forward.3} parent=1 // loop_footer_branch
      %8 = sbr.rel target = $region3
    $region8: #{complex_norm_wrapper_forward.3} parent=1 // loop_exit
      _
    %1084 = vsyncpa [#allocation3], 1
    %s1085 = scalar_lea.sflag [#allocation3], 1
    %1086 = vsyncpa %s1085, 1

</llo_original>
